<compile_context>
chip_gen: v5e
topology: v5e:2x2
jax: 0.10.0
libtpu: 0.0.40
codegen_flags: <defaults>
</compile_context>

<pallas_src>
import functools

import jax
import jax.numpy as jnp
from jax.experimental import pallas as pl
from jax.experimental.pallas import tpu as pltpu

HIDDEN = 32      # param.hidden_channel
BLOCK_NUM = 2    # param.block_num
OUT_C = 3        # output_channel (coords)
LANE = 128       # lane width of the packed output slab
SUBLANE = 16     # pad node count to a multiple of 16 (bf16 sublane packing)


def _round_up(x, m):
    return (x + m - 1) // m * m


# ------------------------------ Fused Pallas kernel -------------------------

def _make_fused_gres_block_kernel(num_block, gh):
    """GResBlock.forward (form_batch=False, symm_update=None) fully fused.

    refs = (a, x, w_lin, b_lin, w_c1, b_c1, ..., w_c3p, b_c3p, o)
      a   : [Np, Np]        bf16  D^{-1/2}(A+I)D^{-1/2}, per-graph (batch-shared)
      x   : [Np, G*Cin]     f32   lane-packed group of G batch elements
      w*  : [G*in, G*out]   bf16  block-diagonal kron(I_G, W)
      b*  : [1, G*out]      f32   lane-tiled biases (conv3 padded to LANE)
      o   : [Np, PACK]      f32   lanes [0,gh)=mid, [gh,gh+G*OUT_C)=coords, 0 pad
    """

    def kernel(*refs):
        a_ref, x_ref = refs[0], refs[1]
        o_ref = refs[-1]
        pr = refs[2:-1]
        pairs = [(pr[2 * j], pr[2 * j + 1]) for j in range(len(pr) // 2)]

        a = a_ref[...]                                        # bf16 [Np, Np]

        def mxu(x, w):                                        # bf16 MXU, f32 acc
            return jnp.dot(x.astype(jnp.bfloat16), w,
                           preferred_element_type=jnp.float32)

        def gcn(x, wb, relu):
            w_ref, b_ref = wb
            h = mxu(x, w_ref[...])                            # X @ blockdiag(W)
            y = jnp.dot(a, h.astype(jnp.bfloat16),            # A_hat @ (XW)
                        preferred_element_type=jnp.float32)
            y = y + b_ref[...]                                # bias, f32 tail
            return jnp.maximum(y, 0.0) if relu else y

        it = iter(pairs)
        w_lin, b_lin = next(it)
        x = mxu(x_ref[...], w_lin[...]) + b_lin[...]          # nn.Linear
        h = gcn(x, next(it), True)                            # conv1 + ReLU
        for _ in range(num_block):                            # GBottleneck chain
            h1 = gcn(h, next(it), True)
            h2 = gcn(h1, next(it), True)
            h = (h + h2) * 0.5                                # (input + x) * 0.5
        out = gcn(h, next(it), False)                         # conv3 (lane-padded)

        # Single lane-dense output slab:
        #   write coords (already placed at lanes [gh, gh+G*OUT_C) by the padded
        #   conv3 weights, zeros elsewhere), then overwrite lanes [0, gh) with
        #   `mid` via a direct masked sub-lane store (bit-exact, no matmul).
        o_ref[...] = out
        o_ref[:, :gh] = h

    return kernel


def fused_gres_block(packed_pairs, x, a_hat, group):
    """One GResBlock as a single VMEM-resident pallas_call.

    x: [B, N, Cin] f32, a_hat: [Np, Np] bf16 (Np = padded N), group: lane-pack G.
    Returns (mid [B, N, HIDDEN], coord [B, N, OUT_C]).
    """
    B, N, Cin = x.shape
    Np = a_hat.shape[0]
    G = group
    Bp = _round_up(B, G)
    ng = Bp // G                         # grid size (batch groups)
    gh = G * HIDDEN
    pack = _round_up(gh + G * OUT_C, LANE)

    # Host-side lane packing: [B,N,Cin] -> [(Bp/G)*Np, G*Cin] (zeros in padding).
    xp = jnp.zeros((Bp, Np, Cin), x.dtype).at[:B, :N, :].set(x)
    xp = xp.reshape(ng, G, Np, Cin).transpose(0, 2, 1, 3).reshape(ng * Np, G * Cin)

    flat = []
    in_specs = [
        pl.BlockSpec((Np, Np), lambda g: (0, 0)),             # A: resident
        pl.BlockSpec((Np, G * Cin), lambda g: (g, 0)),        # per-group X
    ]
    for w, b in packed_pairs:
        flat.append(w)                                        # bf16 block-diag W
        flat.append(b)                                        # f32 tiled bias
        in_specs.append(pl.BlockSpec(w.shape, lambda g: (0, 0)))
        in_specs.append(pl.BlockSpec(b.shape, lambda g: (0, 0)))

    # Explicit VMEM budget: operands + output (double-buffered) + activation slack,
    # capped at 32 MiB so it is safe on v5e/v6e/v7x alike.
    op_bytes = sum(int(v.size) * v.dtype.itemsize for v in [a_hat, xp] + flat)
    out_bytes = Np * pack * 4
    act_bytes = 12 * Np * max(gh, G * Cin, pack) * 4
    vmem_limit = int(min(max(2 * (op_bytes + out_bytes) + act_bytes, 4 << 20),
                         32 << 20))

    packed = pl.pallas_call(
        _make_fused_gres_block_kernel(BLOCK_NUM, gh),
        out_shape=jax.ShapeDtypeStruct((ng * Np, pack), jnp.float32),
        grid=(ng,),
        in_specs=in_specs,
        out_specs=pl.BlockSpec((Np, pack), lambda g: (g, 0)),
        compiler_params=pltpu.CompilerParams(
            dimension_semantics=("parallel",),     # batch groups shard over TCs
            vmem_limit_bytes=vmem_limit),
    )(a_hat, xp, *flat)

    p = packed.reshape(ng, Np, pack)
    mid = p[:, :, :gh].reshape(ng, Np, G, HIDDEN)
    mid = mid.transpose(0, 2, 1, 3).reshape(Bp, Np, HIDDEN)[:B, :N]
    coord = p[:, :, gh:gh + G * OUT_C].reshape(ng, Np, G, OUT_C)
    coord = coord.transpose(0, 2, 1, 3).reshape(Bp, Np, OUT_C)[:B, :N]
    return mid, coord


# ------------------------------ Hoisted preprocessing ------------------------

def dense_norm_adj(edge_index, n, n_pad):
    """GCNConv normalization D^{-1/2}(A+I)D^{-1/2}; zero-padded to [n_pad, n_pad]
    (padded rows/cols are zero so padding never influences real nodes)."""
    src, dst = edge_index[0], edge_index[1]
    a = jnp.zeros((n, n), jnp.float32).at[dst, src].set(1.0)
    a = jnp.minimum(a + jnp.eye(n, dtype=jnp.float32), 1.0)
    deg = a.sum(-1)
    dinv = 1.0 / jnp.sqrt(jnp.maximum(deg, 1e-12))
    a = a * dinv[:, None] * dinv[None, :]
    ap = jnp.zeros((n_pad, n_pad), jnp.float32).at[:n, :n].set(a)
    return ap.astype(jnp.bfloat16)


# ------------------------------ JAX glue (non-kernel ops) --------------------

def graph_project(coords, img_feats, proj_mat):
    # TODO(synk): GraphProject source not provided; Pixel2Mesh-style perspective
    # projection + nearest image-feature sampling, concat with coords.
    B, N, _ = coords.shape
    H, W = img_feats.shape[2], img_feats.shape[3]
    hom = jnp.concatenate([coords, jnp.ones((B, N, 1), coords.dtype)], -1)
    p = jnp.einsum("bij,bnj->bni", proj_mat, hom)
    uv = p[..., :2] / (p[..., 3:4] + 1e-8)
    u = jnp.clip((uv[..., 0] * 0.5 + 0.5) * (W - 1), 0.0, W - 1.0)
    v = jnp.clip((uv[..., 1] * 0.5 + 0.5) * (H - 1), 0.0, H - 1.0)
    ui = jnp.round(u).astype(jnp.int32)
    vi = jnp.round(v).astype(jnp.int32)
    feats = jax.vmap(lambda f, vv, uu: f[:, vv, uu].T)(img_feats, vi, ui)  # [B,N,Cf]
    return jnp.concatenate([coords, feats], -1)


def graph_unpool(x, unpool_idx):
    # TODO(synk): GraphUnpool source not provided; standard edge-midpoint unpool.
    new = 0.5 * (x[:, unpool_idx[:, 0], :] + x[:, unpool_idx[:, 1], :])
    return jnp.concatenate([x, new], axis=1)


# ------------------------------ Parameters -----------------------------------

def _init_lin(key, i, o):
    w = jax.random.normal(key, (i, o), jnp.float32) * (i ** -0.5)
    b = jnp.zeros((1, o), jnp.float32)
    return w, b


def init_gres_block(key, in_c, hidden, out_c, num_block):
    ks = jax.random.split(key, 3 + 2 * num_block)
    pairs = [_init_lin(ks[0], in_c, hidden),                  # nn.Linear
             _init_lin(ks[1], hidden, hidden)]                # conv1
    for i in range(num_block):                                # GBottleneck blocks
        pairs.append(_init_lin(ks[2 + 2 * i], hidden, hidden))
        pairs.append(_init_lin(ks[3 + 2 * i], hidden, hidden))
    pairs.append(_init_lin(ks[2 + 2 * num_block], hidden, out_c))  # conv3
    return pairs


def pack_gres_block_params(pairs, group):
    """Build kernel-ready params once at init: block-diagonal kron(I_G, W) in
    bf16, lane-tiled f32 biases, conv3 lane-padded so coords land at lanes
    [G*HIDDEN, G*HIDDEN + G*OUT_C) of the 128-wide output slab."""
    G = group
    gh = G * HIDDEN
    pack = _round_up(gh + G * OUT_C, LANE)
    eye = jnp.eye(G, dtype=jnp.float32)
    out = []
    for li, (w, b) in enumerate(pairs):
        wb = jnp.kron(eye, w)                                 # [G*in, G*out]
        bb = jnp.tile(b, (1, G))                              # [1, G*out]
        if li == len(pairs) - 1:                              # conv3: pad lanes
            wb = jnp.zeros((wb.shape[0], pack), jnp.float32
                           ).at[:, gh:gh + G * OUT_C].set(wb)
            bb = jnp.zeros((1, pack), jnp.float32
                           ).at[:, gh:gh + G * OUT_C].set(bb)
        out.append((wb.astype(jnp.bfloat16), bb))             # bf16 weights once
    return out


# ------------------------------ GResNet forward -------------------------------

@functools.partial(jax.jit, static_argnames=("global_level", "group"))
def gresnet_forward(params, img_feats, input_coords, edges_list, a_hats,
                    unpool_idxs, proj_mat, faces_list, symm_edge, detail_points,
                    global_level=1, group=1):
    del symm_edge, detail_points  # unused with the fixed param flags
    B = img_feats.shape[0]
    pre_coords, res_coords, res_edges, res_faces, res_vmasks = [], [], [], [], []

    edge1 = jnp.broadcast_to(edges_list[0][None], (B,) + edges_list[0].shape)
    face1 = jnp.broadcast_to(faces_list[0][None], (B,) + faces_list[0].shape)

    x = graph_project(input_coords, img_feats, proj_mat)
    mid, coord1 = fused_gres_block(params["block1"], x, a_hats[0], group)
    coord1 = input_coords + coord1                      # use_offset
    pre_coords.append(input_coords)
    res_coords.append(coord1)
    res_edges.append(edge1)
    res_faces.append(face1)

    for i in range(global_level):
        x = graph_project(res_coords[-1], img_feats, proj_mat)
        x = jnp.concatenate([x, mid], axis=2)
        face2 = jnp.broadcast_to(faces_list[i + 1][None], (B,) + faces_list[i + 1].shape)
        coord1_2 = graph_unpool(res_coords[-1], unpool_idxs[i])
        x = graph_unpool(x, unpool_idxs[i])
        edge2 = jnp.broadcast_to(edges_list[i + 1][None], (B,) + edges_list[i + 1].shape)
        mid, coord2 = fused_gres_block(params["block2_list"][i], x, a_hats[i + 1], group)
        coord2 = coord1_2 + coord2                      # use_offset
        pre_coords.append(coord1_2)
        res_coords.append(coord2)
        res_edges.append(edge2)
        res_faces.append(face2)

    # TODO(synk): use_diff_sub branch (GEdgeMask / gumbel_softmax / ChamferDistance /
    # GraphDiffLineUnpool) is disabled (use_diff_sub=False); its data-dependent
    # dynamic-shape graph surgery has no clean static Pallas equivalent.
    return pre_coords, res_coords, res_edges, res_faces, res_vmasks


# ------------------------------ main -----------------------------------------

if __name__ == "__main__":
    key = jax.random.PRNGKey(0)
    B, N0, Cf, H, W = 2, 16, 13, 16, 16
    global_level = 1
    in_c = 3 + Cf  # GraphProject output channels == GResNet input_channel

    # Lane-pack up to 128/HIDDEN batch elements per grid step (G*HIDDEN lanes wide).
    GROUP = min(B, max(1, LANE // HIDDEN))

    k = jax.random.split(key, 8)
    img_feats = jax.random.normal(k[0], (B, Cf, H, W), jnp.float32)
    input_coords = 0.5 * jax.random.normal(k[1], (B, N0, 3), jnp.float32)
    proj_mat = jnp.broadcast_to(jnp.eye(4, dtype=jnp.float32)[None], (B, 4, 4)) \
        + 0.01 * jax.random.normal(k[2], (B, 4, 4), jnp.float32)

    # level-0 graph: ring over N0 vertices (bidirectional edge_index [2, E])
    idx0 = jnp.arange(N0, dtype=jnp.int32)
    e0 = jnp.stack([jnp.concatenate([idx0, (idx0 + 1) % N0]),
                    jnp.concatenate([(idx0 + 1) % N0, idx0])], 0)
    unpool0 = jnp.stack([idx0, (idx0 + 1) % N0], -1)   # [N0, 2] -> N1 = 2*N0
    N1 = N0 + unpool0.shape[0]
    idx1 = jnp.arange(N1, dtype=jnp.int32)
    e1 = jnp.stack([jnp.concatenate([idx1, (idx1 + 1) % N1]),
                    jnp.concatenate([(idx1 + 1) % N1, idx1])], 0)
    faces0 = jnp.stack([idx0, (idx0 + 1) % N0, (idx0 + 2) % N0], -1)
    faces1 = jnp.stack([idx1, (idx1 + 1) % N1, (idx1 + 2) % N1], -1)
    symm_edge = e0                                      # unused (flags off)
    detail_points = jax.random.normal(k[3], (B, 64, 3), jnp.float32)  # unused

    # Hoisted one-time preprocessing: per-graph normalized dense adjacency per
    # mesh level, node-padded to a multiple of 16 and cast to bf16 for the MXU.
    a_hats = [dense_norm_adj(e0, N0, _round_up(N0, SUBLANE)),
              dense_norm_adj(e1, N1, _round_up(N1, SUBLANE))]

    # Per-layer f32 params -> kernel-ready packed params (bf16 block-diag weights).
    params = {
        "block1": pack_gres_block_params(
            init_gres_block(k[4], in_c, HIDDEN, OUT_C, BLOCK_NUM), GROUP),
        "block2_list": [pack_gres_block_params(
            init_gres_block(k[5], in_c + HIDDEN, HIDDEN, OUT_C, BLOCK_NUM), GROUP)],
    }

    outs = gresnet_forward(params, img_feats, input_coords, [e0, e1], a_hats,
                           [unpool0], proj_mat, [faces0, faces1], symm_edge,
                           detail_points, global_level=global_level, group=GROUP)
    pre_coords, res_coords, res_edges, res_faces, res_vmasks = outs
    jax.block_until_ready(res_coords[-1])
    assert res_coords[0].shape == (B, N0, 3) and res_coords[1].shape == (B, N1, 3)
    assert pre_coords[0].shape == (B, N0, 3)
    print("KERNEL_OK")
</pallas_src>

<mosaic_0001>
module attributes {stable_mosaic.version = 11 : i64} {
  func.func @kernel(%arg0: i32, %arg1: memref<16x16xbf16, #tpu.memory_space<vmem>>, %arg2: memref<16x32xf32, #tpu.memory_space<vmem>>, %arg3: memref<32x64xbf16, #tpu.memory_space<vmem>>, %arg4: memref<1x64xf32, #tpu.memory_space<vmem>>, %arg5: memref<64x64xbf16, #tpu.memory_space<vmem>>, %arg6: memref<1x64xf32, #tpu.memory_space<vmem>>, %arg7: memref<64x64xbf16, #tpu.memory_space<vmem>>, %arg8: memref<1x64xf32, #tpu.memory_space<vmem>>, %arg9: memref<64x64xbf16, #tpu.memory_space<vmem>>, %arg10: memref<1x64xf32, #tpu.memory_space<vmem>>, %arg11: memref<64x64xbf16, #tpu.memory_space<vmem>>, %arg12: memref<1x64xf32, #tpu.memory_space<vmem>>, %arg13: memref<64x64xbf16, #tpu.memory_space<vmem>>, %arg14: memref<1x64xf32, #tpu.memory_space<vmem>>, %arg15: memref<64x128xbf16, #tpu.memory_space<vmem>>, %arg16: memref<1x128xf32, #tpu.memory_space<vmem>>, %arg17: memref<16x128xf32, #tpu.memory_space<vmem>>) attributes {dimension_semantics = [#tpu.dimension_semantics<parallel>], iteration_bounds = array<i64: 1>, scalar_prefetch = 0 : i64, scratch_operands = 0 : i64, tpu.core_type = #tpu.core_type<tc>, window_params = [{pipeline_mode = #tpu.pipeline_mode<synchronous>, transform_indices = @transform_0, window_bounds = array<i64: 16, 16>}, {transform_indices = @transform_1, window_bounds = array<i64: 16, 32>}, {pipeline_mode = #tpu.pipeline_mode<synchronous>, transform_indices = @transform_2, window_bounds = array<i64: 32, 64>}, {pipeline_mode = #tpu.pipeline_mode<synchronous>, transform_indices = @transform_3, window_bounds = array<i64: 1, 64>}, {pipeline_mode = #tpu.pipeline_mode<synchronous>, transform_indices = @transform_4, window_bounds = array<i64: 64, 64>}, {pipeline_mode = #tpu.pipeline_mode<synchronous>, transform_indices = @transform_5, window_bounds = array<i64: 1, 64>}, {pipeline_mode = #tpu.pipeline_mode<synchronous>, transform_indices = @transform_6, window_bounds = array<i64: 64, 64>}, {pipeline_mode = #tpu.pipeline_mode<synchronous>, transform_indices = @transform_7, window_bounds = array<i64: 1, 64>}, {pipeline_mode = #tpu.pipeline_mode<synchronous>, transform_indices = @transform_8, window_bounds = array<i64: 64, 64>}, {pipeline_mode = #tpu.pipeline_mode<synchronous>, transform_indices = @transform_9, window_bounds = array<i64: 1, 64>}, {pipeline_mode = #tpu.pipeline_mode<synchronous>, transform_indices = @transform_10, window_bounds = array<i64: 64, 64>}, {pipeline_mode = #tpu.pipeline_mode<synchronous>, transform_indices = @transform_11, window_bounds = array<i64: 1, 64>}, {pipeline_mode = #tpu.pipeline_mode<synchronous>, transform_indices = @transform_12, window_bounds = array<i64: 64, 64>}, {pipeline_mode = #tpu.pipeline_mode<synchronous>, transform_indices = @transform_13, window_bounds = array<i64: 1, 64>}, {pipeline_mode = #tpu.pipeline_mode<synchronous>, transform_indices = @transform_14, window_bounds = array<i64: 64, 128>}, {pipeline_mode = #tpu.pipeline_mode<synchronous>, transform_indices = @transform_15, window_bounds = array<i64: 1, 128>}, {transform_indices = @transform_16, window_bounds = array<i64: 16, 128>}]} {
    %c0 = arith.constant 0 : index
    %c0_0 = arith.constant 0 : index
    %0 = vector.load %arg1[%c0, %c0_0] : memref<16x16xbf16, #tpu.memory_space<vmem>>, vector<16x16xbf16>
    %c0_1 = arith.constant 0 : index
    %c0_2 = arith.constant 0 : index
    %1 = vector.load %arg2[%c0_1, %c0_2] : memref<16x32xf32, #tpu.memory_space<vmem>>, vector<16x32xf32>
    %c0_3 = arith.constant 0 : index
    %c0_4 = arith.constant 0 : index
    %2 = vector.load %arg3[%c0_3, %c0_4] : memref<32x64xbf16, #tpu.memory_space<vmem>>, vector<32x64xbf16>
    %3 = arith.truncf %1 : vector<16x32xf32> to vector<16x32xbf16>
    %cst = arith.constant dense<0.000000e+00> : vector<16x64xf32>
    %4 = tpu.matmul %3, %2, %cst {dimension_numbers = #tpu.dot_dimension_numbers<[1], [0], [0], [1], [0, 0, 1, 1], [], []>} : vector<16x32xbf16>, vector<32x64xbf16>, vector<16x64xf32> -> vector<16x64xf32>
    %c0_5 = arith.constant 0 : index
    %c0_6 = arith.constant 0 : index
    %5 = vector.load %arg4[%c0_5, %c0_6] : memref<1x64xf32, #tpu.memory_space<vmem>>, vector<1x64xf32>
    %6 = vector.broadcast %5 : vector<1x64xf32> to vector<16x64xf32>
    %7 = arith.addf %4, %6 : vector<16x64xf32>
    %c0_7 = arith.constant 0 : index
    %c0_8 = arith.constant 0 : index
    %8 = vector.load %arg5[%c0_7, %c0_8] : memref<64x64xbf16, #tpu.memory_space<vmem>>, vector<64x64xbf16>
    %9 = arith.truncf %7 : vector<16x64xf32> to vector<16x64xbf16>
    %cst_9 = arith.constant dense<0.000000e+00> : vector<16x64xf32>
    %10 = tpu.matmul %9, %8, %cst_9 {dimension_numbers = #tpu.dot_dimension_numbers<[1], [0], [0], [1], [0, 0, 1, 1], [], []>} : vector<16x64xbf16>, vector<64x64xbf16>, vector<16x64xf32> -> vector<16x64xf32>
    %11 = arith.truncf %10 : vector<16x64xf32> to vector<16x64xbf16>
    %cst_10 = arith.constant dense<0.000000e+00> : vector<16x64xf32>
    %12 = tpu.matmul %0, %11, %cst_10 {dimension_numbers = #tpu.dot_dimension_numbers<[1], [0], [0], [1], [0, 0, 1, 1], [], []>} : vector<16x16xbf16>, vector<16x64xbf16>, vector<16x64xf32> -> vector<16x64xf32>
    %c0_11 = arith.constant 0 : index
    %c0_12 = arith.constant 0 : index
    %13 = vector.load %arg6[%c0_11, %c0_12] : memref<1x64xf32, #tpu.memory_space<vmem>>, vector<1x64xf32>
    %14 = vector.broadcast %13 : vector<1x64xf32> to vector<16x64xf32>
    %15 = arith.addf %12, %14 : vector<16x64xf32>
    %cst_13 = arith.constant 0.000000e+00 : f32
    %16 = vector.broadcast %cst_13 : f32 to vector<16x64xf32>
    %17 = arith.maximumf %15, %16 : vector<16x64xf32>
    %c0_14 = arith.constant 0 : index
    %c0_15 = arith.constant 0 : index
    %18 = vector.load %arg7[%c0_14, %c0_15] : memref<64x64xbf16, #tpu.memory_space<vmem>>, vector<64x64xbf16>
    %19 = arith.truncf %17 : vector<16x64xf32> to vector<16x64xbf16>
    %cst_16 = arith.constant dense<0.000000e+00> : vector<16x64xf32>
    %20 = tpu.matmul %19, %18, %cst_16 {dimension_numbers = #tpu.dot_dimension_numbers<[1], [0], [0], [1], [0, 0, 1, 1], [], []>} : vector<16x64xbf16>, vector<64x64xbf16>, vector<16x64xf32> -> vector<16x64xf32>
    %21 = arith.truncf %20 : vector<16x64xf32> to vector<16x64xbf16>
    %cst_17 = arith.constant dense<0.000000e+00> : vector<16x64xf32>
    %22 = tpu.matmul %0, %21, %cst_17 {dimension_numbers = #tpu.dot_dimension_numbers<[1], [0], [0], [1], [0, 0, 1, 1], [], []>} : vector<16x16xbf16>, vector<16x64xbf16>, vector<16x64xf32> -> vector<16x64xf32>
    %c0_18 = arith.constant 0 : index
    %c0_19 = arith.constant 0 : index
    %23 = vector.load %arg8[%c0_18, %c0_19] : memref<1x64xf32, #tpu.memory_space<vmem>>, vector<1x64xf32>
    %24 = vector.broadcast %23 : vector<1x64xf32> to vector<16x64xf32>
    %25 = arith.addf %22, %24 : vector<16x64xf32>
    %cst_20 = arith.constant 0.000000e+00 : f32
    %26 = vector.broadcast %cst_20 : f32 to vector<16x64xf32>
    %27 = arith.maximumf %25, %26 : vector<16x64xf32>
    %c0_21 = arith.constant 0 : index
    %c0_22 = arith.constant 0 : index
    %28 = vector.load %arg9[%c0_21, %c0_22] : memref<64x64xbf16, #tpu.memory_space<vmem>>, vector<64x64xbf16>
    %29 = arith.truncf %27 : vector<16x64xf32> to vector<16x64xbf16>
    %cst_23 = arith.constant dense<0.000000e+00> : vector<16x64xf32>
    %30 = tpu.matmul %29, %28, %cst_23 {dimension_numbers = #tpu.dot_dimension_numbers<[1], [0], [0], [1], [0, 0, 1, 1], [], []>} : vector<16x64xbf16>, vector<64x64xbf16>, vector<16x64xf32> -> vector<16x64xf32>
    %31 = arith.truncf %30 : vector<16x64xf32> to vector<16x64xbf16>
    %cst_24 = arith.constant dense<0.000000e+00> : vector<16x64xf32>
    %32 = tpu.matmul %0, %31, %cst_24 {dimension_numbers = #tpu.dot_dimension_numbers<[1], [0], [0], [1], [0, 0, 1, 1], [], []>} : vector<16x16xbf16>, vector<16x64xbf16>, vector<16x64xf32> -> vector<16x64xf32>
    %c0_25 = arith.constant 0 : index
    %c0_26 = arith.constant 0 : index
    %33 = vector.load %arg10[%c0_25, %c0_26] : memref<1x64xf32, #tpu.memory_space<vmem>>, vector<1x64xf32>
    %34 = vector.broadcast %33 : vector<1x64xf32> to vector<16x64xf32>
    %35 = arith.addf %32, %34 : vector<16x64xf32>
    %cst_27 = arith.constant 0.000000e+00 : f32
    %36 = vector.broadcast %cst_27 : f32 to vector<16x64xf32>
    %37 = arith.maximumf %35, %36 : vector<16x64xf32>
    %38 = arith.addf %17, %37 : vector<16x64xf32>
    %cst_28 = arith.constant 5.000000e-01 : f32
    %39 = vector.broadcast %cst_28 : f32 to vector<16x64xf32>
    %40 = arith.mulf %38, %39 : vector<16x64xf32>
    %c0_29 = arith.constant 0 : index
    %c0_30 = arith.constant 0 : index
    %41 = vector.load %arg11[%c0_29, %c0_30] : memref<64x64xbf16, #tpu.memory_space<vmem>>, vector<64x64xbf16>
    %42 = arith.truncf %40 : vector<16x64xf32> to vector<16x64xbf16>
    %cst_31 = arith.constant dense<0.000000e+00> : vector<16x64xf32>
    %43 = tpu.matmul %42, %41, %cst_31 {dimension_numbers = #tpu.dot_dimension_numbers<[1], [0], [0], [1], [0, 0, 1, 1], [], []>} : vector<16x64xbf16>, vector<64x64xbf16>, vector<16x64xf32> -> vector<16x64xf32>
    %44 = arith.truncf %43 : vector<16x64xf32> to vector<16x64xbf16>
    %cst_32 = arith.constant dense<0.000000e+00> : vector<16x64xf32>
    %45 = tpu.matmul %0, %44, %cst_32 {dimension_numbers = #tpu.dot_dimension_numbers<[1], [0], [0], [1], [0, 0, 1, 1], [], []>} : vector<16x16xbf16>, vector<16x64xbf16>, vector<16x64xf32> -> vector<16x64xf32>
    %c0_33 = arith.constant 0 : index
    %c0_34 = arith.constant 0 : index
    %46 = vector.load %arg12[%c0_33, %c0_34] : memref<1x64xf32, #tpu.memory_space<vmem>>, vector<1x64xf32>
    %47 = vector.broadcast %46 : vector<1x64xf32> to vector<16x64xf32>
    %48 = arith.addf %45, %47 : vector<16x64xf32>
    %cst_35 = arith.constant 0.000000e+00 : f32
    %49 = vector.broadcast %cst_35 : f32 to vector<16x64xf32>
    %50 = arith.maximumf %48, %49 : vector<16x64xf32>
    %c0_36 = arith.constant 0 : index
    %c0_37 = arith.constant 0 : index
    %51 = vector.load %arg13[%c0_36, %c0_37] : memref<64x64xbf16, #tpu.memory_space<vmem>>, vector<64x64xbf16>
    %52 = arith.truncf %50 : vector<16x64xf32> to vector<16x64xbf16>
    %cst_38 = arith.constant dense<0.000000e+00> : vector<16x64xf32>
    %53 = tpu.matmul %52, %51, %cst_38 {dimension_numbers = #tpu.dot_dimension_numbers<[1], [0], [0], [1], [0, 0, 1, 1], [], []>} : vector<16x64xbf16>, vector<64x64xbf16>, vector<16x64xf32> -> vector<16x64xf32>
    %54 = arith.truncf %53 : vector<16x64xf32> to vector<16x64xbf16>
    %cst_39 = arith.constant dense<0.000000e+00> : vector<16x64xf32>
    %55 = tpu.matmul %0, %54, %cst_39 {dimension_numbers = #tpu.dot_dimension_numbers<[1], [0], [0], [1], [0, 0, 1, 1], [], []>} : vector<16x16xbf16>, vector<16x64xbf16>, vector<16x64xf32> -> vector<16x64xf32>
    %c0_40 = arith.constant 0 : index
    %c0_41 = arith.constant 0 : index
    %56 = vector.load %arg14[%c0_40, %c0_41] : memref<1x64xf32, #tpu.memory_space<vmem>>, vector<1x64xf32>
    %57 = vector.broadcast %56 : vector<1x64xf32> to vector<16x64xf32>
    %58 = arith.addf %55, %57 : vector<16x64xf32>
    %cst_42 = arith.constant 0.000000e+00 : f32
    %59 = vector.broadcast %cst_42 : f32 to vector<16x64xf32>
    %60 = arith.maximumf %58, %59 : vector<16x64xf32>
    %61 = arith.addf %40, %60 : vector<16x64xf32>
    %cst_43 = arith.constant 5.000000e-01 : f32
    %62 = vector.broadcast %cst_43 : f32 to vector<16x64xf32>
    %63 = arith.mulf %61, %62 : vector<16x64xf32>
    %c0_44 = arith.constant 0 : index
    %c0_45 = arith.constant 0 : index
    %64 = vector.load %arg15[%c0_44, %c0_45] : memref<64x128xbf16, #tpu.memory_space<vmem>>, vector<64x128xbf16>
    %65 = arith.truncf %63 : vector<16x64xf32> to vector<16x64xbf16>
    %cst_46 = arith.constant dense<0.000000e+00> : vector<16x128xf32>
    %66 = tpu.matmul %65, %64, %cst_46 {dimension_numbers = #tpu.dot_dimension_numbers<[1], [0], [0], [1], [0, 0, 1, 1], [], []>} : vector<16x64xbf16>, vector<64x128xbf16>, vector<16x128xf32> -> vector<16x128xf32>
    %67 = arith.truncf %66 : vector<16x128xf32> to vector<16x128xbf16>
    %cst_47 = arith.constant dense<0.000000e+00> : vector<16x128xf32>
    %68 = tpu.matmul %0, %67, %cst_47 {dimension_numbers = #tpu.dot_dimension_numbers<[1], [0], [0], [1], [0, 0, 1, 1], [], []>} : vector<16x16xbf16>, vector<16x128xbf16>, vector<16x128xf32> -> vector<16x128xf32>
    %c0_48 = arith.constant 0 : index
    %c0_49 = arith.constant 0 : index
    %69 = vector.load %arg16[%c0_48, %c0_49] : memref<1x128xf32, #tpu.memory_space<vmem>>, vector<1x128xf32>
    %70 = vector.broadcast %69 : vector<1x128xf32> to vector<16x128xf32>
    %71 = arith.addf %68, %70 : vector<16x128xf32>
    %c0_50 = arith.constant 0 : index
    %c0_51 = arith.constant 0 : index
    %72 = vector.load %arg17[%c0_50, %c0_51] : memref<16x128xf32, #tpu.memory_space<vmem>>, vector<16x128xf32>
    tpu.vector_store %arg17[%c0_50, %c0_51], %71 {strides = array<i32>} : memref<16x128xf32, #tpu.memory_space<vmem>>, vector<16x128xf32>,
    %c0_52 = arith.constant 0 : index
    %c0_53 = arith.constant 0 : index
    %73 = vector.load %arg17[%c0_52, %c0_53] : memref<16x128xf32, #tpu.memory_space<vmem>>, vector<16x64xf32>
    tpu.vector_store %arg17[%c0_52, %c0_53], %63 {strides = array<i32>} : memref<16x128xf32, #tpu.memory_space<vmem>>, vector<16x64xf32>,
    return
  }
  func.func @transform_0(%arg0: i32) -> (i32, i32) {
    %c0_i32 = arith.constant 0 : i32
    %c0_i32_0 = arith.constant 0 : i32
    %c0_i32_1 = arith.constant 0 : i32
    return %c0_i32, %c0_i32_0 : i32, i32
  }
  func.func @transform_1(%arg0: i32) -> (i32, i32) {
    %c0_i32 = arith.constant 0 : i32
    %c0_i32_0 = arith.constant 0 : i32
    return %arg0, %c0_i32 : i32, i32
  }
  func.func @transform_2(%arg0: i32) -> (i32, i32) {
    %c0_i32 = arith.constant 0 : i32
    %c0_i32_0 = arith.constant 0 : i32
    %c0_i32_1 = arith.constant 0 : i32
    return %c0_i32, %c0_i32_0 : i32, i32
  }
  func.func @transform_3(%arg0: i32) -> (i32, i32) {
    %c0_i32 = arith.constant 0 : i32
    %c0_i32_0 = arith.constant 0 : i32
    %c0_i32_1 = arith.constant 0 : i32
    return %c0_i32, %c0_i32_0 : i32, i32
  }
  func.func @transform_4(%arg0: i32) -> (i32, i32) {
    %c0_i32 = arith.constant 0 : i32
    %c0_i32_0 = arith.constant 0 : i32
    %c0_i32_1 = arith.constant 0 : i32
    return %c0_i32, %c0_i32_0 : i32, i32
  }
  func.func @transform_5(%arg0: i32) -> (i32, i32) {
    %c0_i32 = arith.constant 0 : i32
    %c0_i32_0 = arith.constant 0 : i32
    %c0_i32_1 = arith.constant 0 : i32
    return %c0_i32, %c0_i32_0 : i32, i32
  }
  func.func @transform_6(%arg0: i32) -> (i32, i32) {
    %c0_i32 = arith.constant 0 : i32
    %c0_i32_0 = arith.constant 0 : i32
    %c0_i32_1 = arith.constant 0 : i32
    return %c0_i32, %c0_i32_0 : i32, i32
  }
  func.func @transform_7(%arg0: i32) -> (i32, i32) {
    %c0_i32 = arith.constant 0 : i32
    %c0_i32_0 = arith.constant 0 : i32
    %c0_i32_1 = arith.constant 0 : i32
    return %c0_i32, %c0_i32_0 : i32, i32
  }
  func.func @transform_8(%arg0: i32) -> (i32, i32) {
    %c0_i32 = arith.constant 0 : i32
    %c0_i32_0 = arith.constant 0 : i32
    %c0_i32_1 = arith.constant 0 : i32
    return %c0_i32, %c0_i32_0 : i32, i32
  }
  func.func @transform_9(%arg0: i32) -> (i32, i32) {
    %c0_i32 = arith.constant 0 : i32
    %c0_i32_0 = arith.constant 0 : i32
    %c0_i32_1 = arith.constant 0 : i32
    return %c0_i32, %c0_i32_0 : i32, i32
  }
  func.func @transform_10(%arg0: i32) -> (i32, i32) {
    %c0_i32 = arith.constant 0 : i32
    %c0_i32_0 = arith.constant 0 : i32
    %c0_i32_1 = arith.constant 0 : i32
    return %c0_i32, %c0_i32_0 : i32, i32
  }
  func.func @transform_11(%arg0: i32) -> (i32, i32) {
    %c0_i32 = arith.constant 0 : i32
    %c0_i32_0 = arith.constant 0 : i32
    %c0_i32_1 = arith.constant 0 : i32
    return %c0_i32, %c0_i32_0 : i32, i32
  }
  func.func @transform_12(%arg0: i32) -> (i32, i32) {
    %c0_i32 = arith.constant 0 : i32
    %c0_i32_0 = arith.constant 0 : i32
    %c0_i32_1 = arith.constant 0 : i32
    return %c0_i32, %c0_i32_0 : i32, i32
  }
  func.func @transform_13(%arg0: i32) -> (i32, i32) {
    %c0_i32 = arith.constant 0 : i32
    %c0_i32_0 = arith.constant 0 : i32
    %c0_i32_1 = arith.constant 0 : i32
    return %c0_i32, %c0_i32_0 : i32, i32
  }
  func.func @transform_14(%arg0: i32) -> (i32, i32) {
    %c0_i32 = arith.constant 0 : i32
    %c0_i32_0 = arith.constant 0 : i32
    %c0_i32_1 = arith.constant 0 : i32
    return %c0_i32, %c0_i32_0 : i32, i32
  }
  func.func @transform_15(%arg0: i32) -> (i32, i32) {
    %c0_i32 = arith.constant 0 : i32
    %c0_i32_0 = arith.constant 0 : i32
    %c0_i32_1 = arith.constant 0 : i32
    return %c0_i32, %c0_i32_0 : i32, i32
  }
  func.func @transform_16(%arg0: i32) -> (i32, i32) {
    %c0_i32 = arith.constant 0 : i32
    %c0_i32_0 = arith.constant 0 : i32
    return %arg0, %c0_i32 : i32, i32
  }
}

module attributes {stable_mosaic.version = 11 : i64} {
  func.func @kernel(%arg0: i32, %arg1: memref<32x32xbf16, #tpu.memory_space<vmem>>, %arg2: memref<32x96xf32, #tpu.memory_space<vmem>>, %arg3: memref<96x64xbf16, #tpu.memory_space<vmem>>, %arg4: memref<1x64xf32, #tpu.memory_space<vmem>>, %arg5: memref<64x64xbf16, #tpu.memory_space<vmem>>, %arg6: memref<1x64xf32, #tpu.memory_space<vmem>>, %arg7: memref<64x64xbf16, #tpu.memory_space<vmem>>, %arg8: memref<1x64xf32, #tpu.memory_space<vmem>>, %arg9: memref<64x64xbf16, #tpu.memory_space<vmem>>, %arg10: memref<1x64xf32, #tpu.memory_space<vmem>>, %arg11: memref<64x64xbf16, #tpu.memory_space<vmem>>, %arg12: memref<1x64xf32, #tpu.memory_space<vmem>>, %arg13: memref<64x64xbf16, #tpu.memory_space<vmem>>, %arg14: memref<1x64xf32, #tpu.memory_space<vmem>>, %arg15: memref<64x128xbf16, #tpu.memory_space<vmem>>, %arg16: memref<1x128xf32, #tpu.memory_space<vmem>>, %arg17: memref<32x128xf32, #tpu.memory_space<vmem>>) attributes {dimension_semantics = [#tpu.dimension_semantics<parallel>], iteration_bounds = array<i64: 1>, scalar_prefetch = 0 : i64, scratch_operands = 0 : i64, tpu.core_type = #tpu.core_type<tc>, window_params = [{pipeline_mode = #tpu.pipeline_mode<synchronous>, transform_indices = @transform_0, window_bounds = array<i64: 32, 32>}, {transform_indices = @transform_1, window_bounds = array<i64: 32, 96>}, {pipeline_mode = #tpu.pipeline_mode<synchronous>, transform_indices = @transform_2, window_bounds = array<i64: 96, 64>}, {pipeline_mode = #tpu.pipeline_mode<synchronous>, transform_indices = @transform_3, window_bounds = array<i64: 1, 64>}, {pipeline_mode = #tpu.pipeline_mode<synchronous>, transform_indices = @transform_4, window_bounds = array<i64: 64, 64>}, {pipeline_mode = #tpu.pipeline_mode<synchronous>, transform_indices = @transform_5, window_bounds = array<i64: 1, 64>}, {pipeline_mode = #tpu.pipeline_mode<synchronous>, transform_indices = @transform_6, window_bounds = array<i64: 64, 64>}, {pipeline_mode = #tpu.pipeline_mode<synchronous>, transform_indices = @transform_7, window_bounds = array<i64: 1, 64>}, {pipeline_mode = #tpu.pipeline_mode<synchronous>, transform_indices = @transform_8, window_bounds = array<i64: 64, 64>}, {pipeline_mode = #tpu.pipeline_mode<synchronous>, transform_indices = @transform_9, window_bounds = array<i64: 1, 64>}, {pipeline_mode = #tpu.pipeline_mode<synchronous>, transform_indices = @transform_10, window_bounds = array<i64: 64, 64>}, {pipeline_mode = #tpu.pipeline_mode<synchronous>, transform_indices = @transform_11, window_bounds = array<i64: 1, 64>}, {pipeline_mode = #tpu.pipeline_mode<synchronous>, transform_indices = @transform_12, window_bounds = array<i64: 64, 64>}, {pipeline_mode = #tpu.pipeline_mode<synchronous>, transform_indices = @transform_13, window_bounds = array<i64: 1, 64>}, {pipeline_mode = #tpu.pipeline_mode<synchronous>, transform_indices = @transform_14, window_bounds = array<i64: 64, 128>}, {pipeline_mode = #tpu.pipeline_mode<synchronous>, transform_indices = @transform_15, window_bounds = array<i64: 1, 128>}, {transform_indices = @transform_16, window_bounds = array<i64: 32, 128>}]} {
    %c0 = arith.constant 0 : index
    %c0_0 = arith.constant 0 : index
    %0 = vector.load %arg1[%c0, %c0_0] : memref<32x32xbf16, #tpu.memory_space<vmem>>, vector<32x32xbf16>
    %c0_1 = arith.constant 0 : index
    %c0_2 = arith.constant 0 : index
    %1 = vector.load %arg2[%c0_1, %c0_2] : memref<32x96xf32, #tpu.memory_space<vmem>>, vector<32x96xf32>
    %c0_3 = arith.constant 0 : index
    %c0_4 = arith.constant 0 : index
    %2 = vector.load %arg3[%c0_3, %c0_4] : memref<96x64xbf16, #tpu.memory_space<vmem>>, vector<96x64xbf16>
    %3 = arith.truncf %1 : vector<32x96xf32> to vector<32x96xbf16>
    %cst = arith.constant dense<0.000000e+00> : vector<32x64xf32>
    %4 = tpu.matmul %3, %2, %cst {dimension_numbers = #tpu.dot_dimension_numbers<[1], [0], [0], [1], [0, 0, 1, 1], [], []>} : vector<32x96xbf16>, vector<96x64xbf16>, vector<32x64xf32> -> vector<32x64xf32>
    %c0_5 = arith.constant 0 : index
    %c0_6 = arith.constant 0 : index
    %5 = vector.load %arg4[%c0_5, %c0_6] : memref<1x64xf32, #tpu.memory_space<vmem>>, vector<1x64xf32>
    %6 = vector.broadcast %5 : vector<1x64xf32> to vector<32x64xf32>
    %7 = arith.addf %4, %6 : vector<32x64xf32>
    %c0_7 = arith.constant 0 : index
    %c0_8 = arith.constant 0 : index
    %8 = vector.load %arg5[%c0_7, %c0_8] : memref<64x64xbf16, #tpu.memory_space<vmem>>, vector<64x64xbf16>
    %9 = arith.truncf %7 : vector<32x64xf32> to vector<32x64xbf16>
    %cst_9 = arith.constant dense<0.000000e+00> : vector<32x64xf32>
    %10 = tpu.matmul %9, %8, %cst_9 {dimension_numbers = #tpu.dot_dimension_numbers<[1], [0], [0], [1], [0, 0, 1, 1], [], []>} : vector<32x64xbf16>, vector<64x64xbf16>, vector<32x64xf32> -> vector<32x64xf32>
    %11 = arith.truncf %10 : vector<32x64xf32> to vector<32x64xbf16>
    %cst_10 = arith.constant dense<0.000000e+00> : vector<32x64xf32>
    %12 = tpu.matmul %0, %11, %cst_10 {dimension_numbers = #tpu.dot_dimension_numbers<[1], [0], [0], [1], [0, 0, 1, 1], [], []>} : vector<32x32xbf16>, vector<32x64xbf16>, vector<32x64xf32> -> vector<32x64xf32>
    %c0_11 = arith.constant 0 : index
    %c0_12 = arith.constant 0 : index
    %13 = vector.load %arg6[%c0_11, %c0_12] : memref<1x64xf32, #tpu.memory_space<vmem>>, vector<1x64xf32>
    %14 = vector.broadcast %13 : vector<1x64xf32> to vector<32x64xf32>
    %15 = arith.addf %12, %14 : vector<32x64xf32>
    %cst_13 = arith.constant 0.000000e+00 : f32
    %16 = vector.broadcast %cst_13 : f32 to vector<32x64xf32>
    %17 = arith.maximumf %15, %16 : vector<32x64xf32>
    %c0_14 = arith.constant 0 : index
    %c0_15 = arith.constant 0 : index
    %18 = vector.load %arg7[%c0_14, %c0_15] : memref<64x64xbf16, #tpu.memory_space<vmem>>, vector<64x64xbf16>
    %19 = arith.truncf %17 : vector<32x64xf32> to vector<32x64xbf16>
    %cst_16 = arith.constant dense<0.000000e+00> : vector<32x64xf32>
    %20 = tpu.matmul %19, %18, %cst_16 {dimension_numbers = #tpu.dot_dimension_numbers<[1], [0], [0], [1], [0, 0, 1, 1], [], []>} : vector<32x64xbf16>, vector<64x64xbf16>, vector<32x64xf32> -> vector<32x64xf32>
    %21 = arith.truncf %20 : vector<32x64xf32> to vector<32x64xbf16>
    %cst_17 = arith.constant dense<0.000000e+00> : vector<32x64xf32>
    %22 = tpu.matmul %0, %21, %cst_17 {dimension_numbers = #tpu.dot_dimension_numbers<[1], [0], [0], [1], [0, 0, 1, 1], [], []>} : vector<32x32xbf16>, vector<32x64xbf16>, vector<32x64xf32> -> vector<32x64xf32>
    %c0_18 = arith.constant 0 : index
    %c0_19 = arith.constant 0 : index
    %23 = vector.load %arg8[%c0_18, %c0_19] : memref<1x64xf32, #tpu.memory_space<vmem>>, vector<1x64xf32>
    %24 = vector.broadcast %23 : vector<1x64xf32> to vector<32x64xf32>
    %25 = arith.addf %22, %24 : vector<32x64xf32>
    %cst_20 = arith.constant 0.000000e+00 : f32
    %26 = vector.broadcast %cst_20 : f32 to vector<32x64xf32>
    %27 = arith.maximumf %25, %26 : vector<32x64xf32>
    %c0_21 = arith.constant 0 : index
    %c0_22 = arith.constant 0 : index
    %28 = vector.load %arg9[%c0_21, %c0_22] : memref<64x64xbf16, #tpu.memory_space<vmem>>, vector<64x64xbf16>
    %29 = arith.truncf %27 : vector<32x64xf32> to vector<32x64xbf16>
    %cst_23 = arith.constant dense<0.000000e+00> : vector<32x64xf32>
    %30 = tpu.matmul %29, %28, %cst_23 {dimension_numbers = #tpu.dot_dimension_numbers<[1], [0], [0], [1], [0, 0, 1, 1], [], []>} : vector<32x64xbf16>, vector<64x64xbf16>, vector<32x64xf32> -> vector<32x64xf32>
    %31 = arith.truncf %30 : vector<32x64xf32> to vector<32x64xbf16>
    %cst_24 = arith.constant dense<0.000000e+00> : vector<32x64xf32>
    %32 = tpu.matmul %0, %31, %cst_24 {dimension_numbers = #tpu.dot_dimension_numbers<[1], [0], [0], [1], [0, 0, 1, 1], [], []>} : vector<32x32xbf16>, vector<32x64xbf16>, vector<32x64xf32> -> vector<32x64xf32>
    %c0_25 = arith.constant 0 : index
    %c0_26 = arith.constant 0 : index
    %33 = vector.load %arg10[%c0_25, %c0_26] : memref<1x64xf32, #tpu.memory_space<vmem>>, vector<1x64xf32>
    %34 = vector.broadcast %33 : vector<1x64xf32> to vector<32x64xf32>
    %35 = arith.addf %32, %34 : vector<32x64xf32>
    %cst_27 = arith.constant 0.000000e+00 : f32
    %36 = vector.broadcast %cst_27 : f32 to vector<32x64xf32>
    %37 = arith.maximumf %35, %36 : vector<32x64xf32>
    %38 = arith.addf %17, %37 : vector<32x64xf32>
    %cst_28 = arith.constant 5.000000e-01 : f32
    %39 = vector.broadcast %cst_28 : f32 to vector<32x64xf32>
    %40 = arith.mulf %38, %39 : vector<32x64xf32>
    %c0_29 = arith.constant 0 : index
    %c0_30 = arith.constant 0 : index
    %41 = vector.load %arg11[%c0_29, %c0_30] : memref<64x64xbf16, #tpu.memory_space<vmem>>, vector<64x64xbf16>
    %42 = arith.truncf %40 : vector<32x64xf32> to vector<32x64xbf16>
    %cst_31 = arith.constant dense<0.000000e+00> : vector<32x64xf32>
    %43 = tpu.matmul %42, %41, %cst_31 {dimension_numbers = #tpu.dot_dimension_numbers<[1], [0], [0], [1], [0, 0, 1, 1], [], []>} : vector<32x64xbf16>, vector<64x64xbf16>, vector<32x64xf32> -> vector<32x64xf32>
    %44 = arith.truncf %43 : vector<32x64xf32> to vector<32x64xbf16>
    %cst_32 = arith.constant dense<0.000000e+00> : vector<32x64xf32>
    %45 = tpu.matmul %0, %44, %cst_32 {dimension_numbers = #tpu.dot_dimension_numbers<[1], [0], [0], [1], [0, 0, 1, 1], [], []>} : vector<32x32xbf16>, vector<32x64xbf16>, vector<32x64xf32> -> vector<32x64xf32>
    %c0_33 = arith.constant 0 : index
    %c0_34 = arith.constant 0 : index
    %46 = vector.load %arg12[%c0_33, %c0_34] : memref<1x64xf32, #tpu.memory_space<vmem>>, vector<1x64xf32>
    %47 = vector.broadcast %46 : vector<1x64xf32> to vector<32x64xf32>
    %48 = arith.addf %45, %47 : vector<32x64xf32>
    %cst_35 = arith.constant 0.000000e+00 : f32
    %49 = vector.broadcast %cst_35 : f32 to vector<32x64xf32>
    %50 = arith.maximumf %48, %49 : vector<32x64xf32>
    %c0_36 = arith.constant 0 : index
    %c0_37 = arith.constant 0 : index
    %51 = vector.load %arg13[%c0_36, %c0_37] : memref<64x64xbf16, #tpu.memory_space<vmem>>, vector<64x64xbf16>
    %52 = arith.truncf %50 : vector<32x64xf32> to vector<32x64xbf16>
    %cst_38 = arith.constant dense<0.000000e+00> : vector<32x64xf32>
    %53 = tpu.matmul %52, %51, %cst_38 {dimension_numbers = #tpu.dot_dimension_numbers<[1], [0], [0], [1], [0, 0, 1, 1], [], []>} : vector<32x64xbf16>, vector<64x64xbf16>, vector<32x64xf32> -> vector<32x64xf32>
    %54 = arith.truncf %53 : vector<32x64xf32> to vector<32x64xbf16>
    %cst_39 = arith.constant dense<0.000000e+00> : vector<32x64xf32>
    %55 = tpu.matmul %0, %54, %cst_39 {dimension_numbers = #tpu.dot_dimension_numbers<[1], [0], [0], [1], [0, 0, 1, 1], [], []>} : vector<32x32xbf16>, vector<32x64xbf16>, vector<32x64xf32> -> vector<32x64xf32>
    %c0_40 = arith.constant 0 : index
    %c0_41 = arith.constant 0 : index
    %56 = vector.load %arg14[%c0_40, %c0_41] : memref<1x64xf32, #tpu.memory_space<vmem>>, vector<1x64xf32>
    %57 = vector.broadcast %56 : vector<1x64xf32> to vector<32x64xf32>
    %58 = arith.addf %55, %57 : vector<32x64xf32>
    %cst_42 = arith.constant 0.000000e+00 : f32
    %59 = vector.broadcast %cst_42 : f32 to vector<32x64xf32>
    %60 = arith.maximumf %58, %59 : vector<32x64xf32>
    %61 = arith.addf %40, %60 : vector<32x64xf32>
    %cst_43 = arith.constant 5.000000e-01 : f32
    %62 = vector.broadcast %cst_43 : f32 to vector<32x64xf32>
    %63 = arith.mulf %61, %62 : vector<32x64xf32>
    %c0_44 = arith.constant 0 : index
    %c0_45 = arith.constant 0 : index
    %64 = vector.load %arg15[%c0_44, %c0_45] : memref<64x128xbf16, #tpu.memory_space<vmem>>, vector<64x128xbf16>
    %65 = arith.truncf %63 : vector<32x64xf32> to vector<32x64xbf16>
    %cst_46 = arith.constant dense<0.000000e+00> : vector<32x128xf32>
    %66 = tpu.matmul %65, %64, %cst_46 {dimension_numbers = #tpu.dot_dimension_numbers<[1], [0], [0], [1], [0, 0, 1, 1], [], []>} : vector<32x64xbf16>, vector<64x128xbf16>, vector<32x128xf32> -> vector<32x128xf32>
    %67 = arith.truncf %66 : vector<32x128xf32> to vector<32x128xbf16>
    %cst_47 = arith.constant dense<0.000000e+00> : vector<32x128xf32>
    %68 = tpu.matmul %0, %67, %cst_47 {dimension_numbers = #tpu.dot_dimension_numbers<[1], [0], [0], [1], [0, 0, 1, 1], [], []>} : vector<32x32xbf16>, vector<32x128xbf16>, vector<32x128xf32> -> vector<32x128xf32>
    %c0_48 = arith.constant 0 : index
    %c0_49 = arith.constant 0 : index
    %69 = vector.load %arg16[%c0_48, %c0_49] : memref<1x128xf32, #tpu.memory_space<vmem>>, vector<1x128xf32>
    %70 = vector.broadcast %69 : vector<1x128xf32> to vector<32x128xf32>
    %71 = arith.addf %68, %70 : vector<32x128xf32>
    %c0_50 = arith.constant 0 : index
    %c0_51 = arith.constant 0 : index
    %72 = vector.load %arg17[%c0_50, %c0_51] : memref<32x128xf32, #tpu.memory_space<vmem>>, vector<32x128xf32>
    tpu.vector_store %arg17[%c0_50, %c0_51], %71 {strides = array<i32>} : memref<32x128xf32, #tpu.memory_space<vmem>>, vector<32x128xf32>,
    %c0_52 = arith.constant 0 : index
    %c0_53 = arith.constant 0 : index
    %73 = vector.load %arg17[%c0_52, %c0_53] : memref<32x128xf32, #tpu.memory_space<vmem>>, vector<32x64xf32>
    tpu.vector_store %arg17[%c0_52, %c0_53], %63 {strides = array<i32>} : memref<32x128xf32, #tpu.memory_space<vmem>>, vector<32x64xf32>,
    return
  }
  func.func @transform_0(%arg0: i32) -> (i32, i32) {
    %c0_i32 = arith.constant 0 : i32
    %c0_i32_0 = arith.constant 0 : i32
    %c0_i32_1 = arith.constant 0 : i32
    return %c0_i32, %c0_i32_0 : i32, i32
  }
  func.func @transform_1(%arg0: i32) -> (i32, i32) {
    %c0_i32 = arith.constant 0 : i32
    %c0_i32_0 = arith.constant 0 : i32
    return %arg0, %c0_i32 : i32, i32
  }
  func.func @transform_2(%arg0: i32) -> (i32, i32) {
    %c0_i32 = arith.constant 0 : i32
    %c0_i32_0 = arith.constant 0 : i32
    %c0_i32_1 = arith.constant 0 : i32
    return %c0_i32, %c0_i32_0 : i32, i32
  }
  func.func @transform_3(%arg0: i32) -> (i32, i32) {
    %c0_i32 = arith.constant 0 : i32
    %c0_i32_0 = arith.constant 0 : i32
    %c0_i32_1 = arith.constant 0 : i32
    return %c0_i32, %c0_i32_0 : i32, i32
  }
  func.func @transform_4(%arg0: i32) -> (i32, i32) {
    %c0_i32 = arith.constant 0 : i32
    %c0_i32_0 = arith.constant 0 : i32
    %c0_i32_1 = arith.constant 0 : i32
    return %c0_i32, %c0_i32_0 : i32, i32
  }
  func.func @transform_5(%arg0: i32) -> (i32, i32) {
    %c0_i32 = arith.constant 0 : i32
    %c0_i32_0 = arith.constant 0 : i32
    %c0_i32_1 = arith.constant 0 : i32
    return %c0_i32, %c0_i32_0 : i32, i32
  }
  func.func @transform_6(%arg0: i32) -> (i32, i32) {
    %c0_i32 = arith.constant 0 : i32
    %c0_i32_0 = arith.constant 0 : i32
    %c0_i32_1 = arith.constant 0 : i32
    return %c0_i32, %c0_i32_0 : i32, i32
  }
  func.func @transform_7(%arg0: i32) -> (i32, i32) {
    %c0_i32 = arith.constant 0 : i32
    %c0_i32_0 = arith.constant 0 : i32
    %c0_i32_1 = arith.constant 0 : i32
    return %c0_i32, %c0_i32_0 : i32, i32
  }
  func.func @transform_8(%arg0: i32) -> (i32, i32) {
    %c0_i32 = arith.constant 0 : i32
    %c0_i32_0 = arith.constant 0 : i32
    %c0_i32_1 = arith.constant 0 : i32
    return %c0_i32, %c0_i32_0 : i32, i32
  }
  func.func @transform_9(%arg0: i32) -> (i32, i32) {
    %c0_i32 = arith.constant 0 : i32
    %c0_i32_0 = arith.constant 0 : i32
    %c0_i32_1 = arith.constant 0 : i32
    return %c0_i32, %c0_i32_0 : i32, i32
  }
  func.func @transform_10(%arg0: i32) -> (i32, i32) {
    %c0_i32 = arith.constant 0 : i32
    %c0_i32_0 = arith.constant 0 : i32
    %c0_i32_1 = arith.constant 0 : i32
    return %c0_i32, %c0_i32_0 : i32, i32
  }
  func.func @transform_11(%arg0: i32) -> (i32, i32) {
    %c0_i32 = arith.constant 0 : i32
    %c0_i32_0 = arith.constant 0 : i32
    %c0_i32_1 = arith.constant 0 : i32
    return %c0_i32, %c0_i32_0 : i32, i32
  }
  func.func @transform_12(%arg0: i32) -> (i32, i32) {
    %c0_i32 = arith.constant 0 : i32
    %c0_i32_0 = arith.constant 0 : i32
    %c0_i32_1 = arith.constant 0 : i32
    return %c0_i32, %c0_i32_0 : i32, i32
  }
  func.func @transform_13(%arg0: i32) -> (i32, i32) {
    %c0_i32 = arith.constant 0 : i32
    %c0_i32_0 = arith.constant 0 : i32
    %c0_i32_1 = arith.constant 0 : i32
    return %c0_i32, %c0_i32_0 : i32, i32
  }
  func.func @transform_14(%arg0: i32) -> (i32, i32) {
    %c0_i32 = arith.constant 0 : i32
    %c0_i32_0 = arith.constant 0 : i32
    %c0_i32_1 = arith.constant 0 : i32
    return %c0_i32, %c0_i32_0 : i32, i32
  }
  func.func @transform_15(%arg0: i32) -> (i32, i32) {
    %c0_i32 = arith.constant 0 : i32
    %c0_i32_0 = arith.constant 0 : i32
    %c0_i32_1 = arith.constant 0 : i32
    return %c0_i32, %c0_i32_0 : i32, i32
  }
  func.func @transform_16(%arg0: i32) -> (i32, i32) {
    %c0_i32 = arith.constant 0 : i32
    %c0_i32_0 = arith.constant 0 : i32
    return %arg0, %c0_i32 : i32, i32
  }
}

</mosaic_0001>

<llo_original>
// kernel: gresnet_forward.2
$region0: #{gresnet_forward.2}
  #allocation0 [shape = 'u32[]', space=smem, size = 0x4, offset = 0x4, fixed_abs, tag = 'smem constant byte address 0x4 - core index']
  #allocation1 [shape = 'u32[72,128]{1,0:T(1,128)}', space=vmem, size = 0x9000, scoped, tag = 'internal scratch']
  %s0 = inlined_call_operand.vmem [shape: bf16[16,16], index: 0, kind: input, shape index: {}]
  %s1 = inlined_call_operand.vmem [shape: f32[16,32], index: 1, kind: input, shape index: {}]
  %s2 = inlined_call_operand.vmem [shape: bf16[32,64], index: 2, kind: input, shape index: {}]
  %s3 = inlined_call_operand.vmem [shape: f32[1,64], index: 3, kind: input, shape index: {}]
  %s4 = inlined_call_operand.vmem [shape: bf16[64,64], index: 4, kind: input, shape index: {}]
  %s5 = inlined_call_operand.vmem [shape: f32[1,64], index: 5, kind: input, shape index: {}]
  %s6 = inlined_call_operand.vmem [shape: bf16[64,64], index: 6, kind: input, shape index: {}]
  %s7 = inlined_call_operand.vmem [shape: f32[1,64], index: 7, kind: input, shape index: {}]
  %s8 = inlined_call_operand.vmem [shape: bf16[64,64], index: 8, kind: input, shape index: {}]
  %s9 = inlined_call_operand.vmem [shape: f32[1,64], index: 9, kind: input, shape index: {}]
  %s10 = inlined_call_operand.vmem [shape: bf16[64,64], index: 10, kind: input, shape index: {}]
  %s11 = inlined_call_operand.vmem [shape: f32[1,64], index: 11, kind: input, shape index: {}]
  %s12 = inlined_call_operand.vmem [shape: bf16[64,64], index: 12, kind: input, shape index: {}]
  %s13 = inlined_call_operand.vmem [shape: f32[1,64], index: 13, kind: input, shape index: {}]
  %s14 = inlined_call_operand.vmem [shape: bf16[64,128], index: 14, kind: input, shape index: {}]
  %s15 = inlined_call_operand.vmem [shape: f32[1,128], index: 15, kind: input, shape index: {}]
  %s16 = inlined_call_operand.vmem [shape: f32[16,128], index: 16, kind: output, shape index: {}]
  %s17 = sld [smem:[#allocation0]]
  $region74: #{gresnet_forward.2} parent=0
    _
  %s19 = ssub.s32 1, %s17
  %s20 = scalar_select 0, %s19, %s17
  // Predicated region
  $region2: #{gresnet_forward.2} parent=0 // pred_check
    _
  $region3: #{gresnet_forward.2} parent=0 // pred_check_branch
    %22 = sbr.rel (0) target = $region5
  $region4: #{gresnet_forward.2} parent=0 // pred_region
    _
  $region5: #{gresnet_forward.2} parent=0 // pred_fallthru
    _
  // Predicated region
  $region6: #{gresnet_forward.2} parent=0 // pred_check
    _
  $region7: #{gresnet_forward.2} parent=0 // pred_check_branch
    %24 = sbr.rel (0) target = $region9
  $region8: #{gresnet_forward.2} parent=0 // pred_region
    _
  $region9: #{gresnet_forward.2} parent=0 // pred_fallthru
    _
  // Predicated region
  $region10: #{gresnet_forward.2} parent=0 // pred_check
    _
  $region11: #{gresnet_forward.2} parent=0 // pred_check_branch
    %26 = sbr.rel (0) target = $region13
  $region12: #{gresnet_forward.2} parent=0 // pred_region
    _
  $region13: #{gresnet_forward.2} parent=0 // pred_fallthru
    _
  // Predicated region
  $region14: #{gresnet_forward.2} parent=0 // pred_check
    _
  $region15: #{gresnet_forward.2} parent=0 // pred_check_branch
    %28 = sbr.rel (0) target = $region17
  $region16: #{gresnet_forward.2} parent=0 // pred_region
    _
  $region17: #{gresnet_forward.2} parent=0 // pred_fallthru
    _
  // Predicated region
  $region18: #{gresnet_forward.2} parent=0 // pred_check
    _
  $region19: #{gresnet_forward.2} parent=0 // pred_check_branch
    %30 = sbr.rel (0) target = $region21
  $region20: #{gresnet_forward.2} parent=0 // pred_region
    _
  $region21: #{gresnet_forward.2} parent=0 // pred_fallthru
    _
  // Predicated region
  $region22: #{gresnet_forward.2} parent=0 // pred_check
    _
  $region23: #{gresnet_forward.2} parent=0 // pred_check_branch
    %32 = sbr.rel (0) target = $region25
  $region24: #{gresnet_forward.2} parent=0 // pred_region
    _
  $region25: #{gresnet_forward.2} parent=0 // pred_fallthru
    _
  // Predicated region
  $region26: #{gresnet_forward.2} parent=0 // pred_check
    _
  $region27: #{gresnet_forward.2} parent=0 // pred_check_branch
    %34 = sbr.rel (0) target = $region29
  $region28: #{gresnet_forward.2} parent=0 // pred_region
    _
  $region29: #{gresnet_forward.2} parent=0 // pred_fallthru
    _
  // Predicated region
  $region30: #{gresnet_forward.2} parent=0 // pred_check
    _
  $region31: #{gresnet_forward.2} parent=0 // pred_check_branch
    %36 = sbr.rel (0) target = $region33
  $region32: #{gresnet_forward.2} parent=0 // pred_region
    _
  $region33: #{gresnet_forward.2} parent=0 // pred_fallthru
    _
  // Predicated region
  $region34: #{gresnet_forward.2} parent=0 // pred_check
    _
  $region35: #{gresnet_forward.2} parent=0 // pred_check_branch
    %38 = sbr.rel (0) target = $region37
  $region36: #{gresnet_forward.2} parent=0 // pred_region
    _
  $region37: #{gresnet_forward.2} parent=0 // pred_fallthru
    _
  // Predicated region
  $region38: #{gresnet_forward.2} parent=0 // pred_check
    _
  $region39: #{gresnet_forward.2} parent=0 // pred_check_branch
    %40 = sbr.rel (0) target = $region41
  $region40: #{gresnet_forward.2} parent=0 // pred_region
    _
  $region41: #{gresnet_forward.2} parent=0 // pred_fallthru
    _
  // Predicated region
  $region42: #{gresnet_forward.2} parent=0 // pred_check
    _
  $region43: #{gresnet_forward.2} parent=0 // pred_check_branch
    %42 = sbr.rel (0) target = $region45
  $region44: #{gresnet_forward.2} parent=0 // pred_region
    _
  $region45: #{gresnet_forward.2} parent=0 // pred_fallthru
    _
  // Predicated region
  $region46: #{gresnet_forward.2} parent=0 // pred_check
    _
  $region47: #{gresnet_forward.2} parent=0 // pred_check_branch
    %44 = sbr.rel (0) target = $region49
  $region48: #{gresnet_forward.2} parent=0 // pred_region
    _
  $region49: #{gresnet_forward.2} parent=0 // pred_fallthru
    _
  // Predicated region
  $region50: #{gresnet_forward.2} parent=0 // pred_check
    _
  $region51: #{gresnet_forward.2} parent=0 // pred_check_branch
    %46 = sbr.rel (0) target = $region53
  $region52: #{gresnet_forward.2} parent=0 // pred_region
    _
  $region53: #{gresnet_forward.2} parent=0 // pred_fallthru
    _
  // Predicated region
  $region54: #{gresnet_forward.2} parent=0 // pred_check
    _
  $region55: #{gresnet_forward.2} parent=0 // pred_check_branch
    %48 = sbr.rel (0) target = $region57
  $region56: #{gresnet_forward.2} parent=0 // pred_region
    _
  $region57: #{gresnet_forward.2} parent=0 // pred_fallthru
    _
  // Predicated region
  $region58: #{gresnet_forward.2} parent=0 // pred_check
    _
  $region59: #{gresnet_forward.2} parent=0 // pred_check_branch
    %50 = sbr.rel (0) target = $region61
  $region60: #{gresnet_forward.2} parent=0 // pred_region
    _
  $region61: #{gresnet_forward.2} parent=0 // pred_fallthru
    _
  // Predicated region
  $region62: #{gresnet_forward.2} parent=0 // pred_check
    _
  $region63: #{gresnet_forward.2} parent=0 // pred_check_branch
    %52 = sbr.rel (0) target = $region65
  $region64: #{gresnet_forward.2} parent=0 // pred_region
    _
  $region65: #{gresnet_forward.2} parent=0 // pred_fallthru
    _
  %v54 = vld [vmem:[%s0] sm:$0xf]
  %v55 = vld [vmem:[%s0 + $0x4] sm:$0xf]
  %v56 = vld [vmem:[%s1] sm:$0xff]
  %v57 = vld [vmem:[%s1 + $0x8] sm:$0xff]
  %v58 = vld [vmem:[%s2] sm:$0xf]
  %v59 = vld [vmem:[%s2 + $0x4] sm:$0xf]
  %v60 = vld [vmem:[%s2 + $0x8] sm:$0xf]
  %v61 = vld [vmem:[%s2 + $0xc] sm:$0xf]
  %v62 = vpack.c.bf16 %v57, %v56
  %v63 = vld [vmem:[%s3] sm:$0x1]
  %v65 = vperm.slane %v63, 0
  %v71 = vunpack.c.l.b16 %v58
  %v72 = vunpack.c.l.b16 %v59
  %v73 = vunpack.c.l.b16 %v60
  %v74 = vunpack.c.l.b16 %v61
  %v75 = vpack.c.b16 %v72, %v71
  %v76 = vpack.c.b16 %v74, %v73
  %vm79 = vcmask 261120
  %v81 = vsel %vm79, %v62, 0
  %83 = vmatpush.bf16.msra.mxu0 0
  %84 = vmatpush.bf16.msra.mxu0 0
  %85 = vmatpush.bf16.msra.mxu0 0
  %86 = vmatpush.bf16.msra.mxu0 0
  %87 = vmatpush.bf16.msra.mxu0 0
  %88 = vmatpush.bf16.msra.mxu0 0
  %89 = vmatpush.bf16.msra.mxu0 %v76
  %90 = vmatpush.bf16.msra.mxu0 %v75
  %91 = vmatmul.bf16.gmra.mxu0 %v81
  %v92 = vpop.f32.mrf.mxu0
  %v93 = vadd.f32 %v65, %v92
  %v94 = vpop.f32.mrf.mxu0
  %v95 = vadd.f32 %v65, %v94
  %96 = vdwg.mxu0
  %v97 = vld [vmem:[%s4] sm:$0xf]
  %v98 = vld [vmem:[%s4 + $0x4] sm:$0xf]
  %v99 = vld [vmem:[%s4 + $0x8] sm:$0xf]
  %v100 = vld [vmem:[%s4 + $0xc] sm:$0xf]
  %v101 = vld [vmem:[%s4 + $0x10] sm:$0xf]
  %v102 = vld [vmem:[%s4 + $0x14] sm:$0xf]
  %v103 = vld [vmem:[%s4 + $0x18] sm:$0xf]
  %v104 = vld [vmem:[%s4 + $0x1c] sm:$0xf]
  %v105 = vpack.c.bf16 %v95, %v93
  %v114 = vunpack.c.l.b16 %v97
  %v115 = vunpack.c.l.b16 %v98
  %v116 = vunpack.c.l.b16 %v99
  %v117 = vunpack.c.l.b16 %v100
  %v118 = vunpack.c.l.b16 %v101
  %v119 = vunpack.c.l.b16 %v102
  %v120 = vunpack.c.l.b16 %v103
  %v121 = vunpack.c.l.b16 %v104
  %v122 = vpack.c.b16 %v115, %v114
  %v123 = vpack.c.b16 %v117, %v116
  %v124 = vpack.c.b16 %v119, %v118
  %v125 = vpack.c.b16 %v121, %v120
  %vm130 = vcmask 523264
  %v132 = vsel %vm130, %v105, 0
  %134 = vmatpush.bf16.msra.mxu0 0
  %135 = vmatpush.bf16.msra.mxu0 0
  %136 = vmatpush.bf16.msra.mxu0 0
  %137 = vmatpush.bf16.msra.mxu0 0
  %138 = vmatpush.bf16.msra.mxu0 %v125
  %139 = vmatpush.bf16.msra.mxu0 %v124
  %140 = vmatpush.bf16.msra.mxu0 %v123
  %141 = vmatpush.bf16.msra.mxu0 %v122
  %142 = vmatmul.bf16.gmra.mxu0 %v132
  %v143 = vpop.f32.mrf.mxu0
  %v144 = vadd.f32 0.0, %v143
  %v145 = vpop.f32.mrf.mxu0
  %v146 = vadd.f32 0.0, %v145
  %147 = vdwg.mxu0
  %v148 = vpack.c.bf16 %v146, %v144
  %v149 = vld [vmem:[%s5] sm:$0x1]
  %v151 = vperm.slane %v149, 0
  %v155 = vunpack.c.l.b16 %v54
  %v156 = vunpack.c.l.b16 %v55
  %v157 = vpack.c.b16 %v156, %v155
  %vm158 = vcmask 130048
  %v160 = vsel %vm158, %v157, 0
  %162 = vmatpush.bf16.msra.mxu0 0
  %163 = vmatpush.bf16.msra.mxu0 0
  %164 = vmatpush.bf16.msra.mxu0 0
  %165 = vmatpush.bf16.msra.mxu0 0
  %166 = vmatpush.bf16.msra.mxu0 0
  %167 = vmatpush.bf16.msra.mxu0 0
  %168 = vmatpush.bf16.msra.mxu0 0
  %169 = vmatpush.bf16.msra.mxu0 %v148
  %170 = vmatmul.bf16.gmra.mxu0 %v160
  %v171 = vpop.f32.mrf.mxu0
  %v172 = vadd.f32 %v151, %v171
  %v173 = vpop.f32.mrf.mxu0
  %v174 = vadd.f32 %v151, %v173
  %175 = vdwg.mxu0
  %v176 = vmax.f32 %v172, 0.0
  %v177 = vmax.f32 %v174, 0.0
  %v178 = vld [vmem:[%s6] sm:$0xf]
  %v179 = vld [vmem:[%s6 + $0x4] sm:$0xf]
  %v180 = vld [vmem:[%s6 + $0x8] sm:$0xf]
  %v181 = vld [vmem:[%s6 + $0xc] sm:$0xf]
  %v182 = vld [vmem:[%s6 + $0x10] sm:$0xf]
  %v183 = vld [vmem:[%s6 + $0x14] sm:$0xf]
  %v184 = vld [vmem:[%s6 + $0x18] sm:$0xf]
  %v185 = vld [vmem:[%s6 + $0x1c] sm:$0xf]
  %v186 = vpack.c.bf16 %v177, %v176
  %v195 = vunpack.c.l.b16 %v178
  %v196 = vunpack.c.l.b16 %v179
  %v197 = vunpack.c.l.b16 %v180
  %v198 = vunpack.c.l.b16 %v181
  %v199 = vunpack.c.l.b16 %v182
  %v200 = vunpack.c.l.b16 %v183
  %v201 = vunpack.c.l.b16 %v184
  %v202 = vunpack.c.l.b16 %v185
  %v203 = vpack.c.b16 %v196, %v195
  %v204 = vpack.c.b16 %v198, %v197
  %v205 = vpack.c.b16 %v200, %v199
  %v206 = vpack.c.b16 %v202, %v201
  %v212 = vsel %vm130, %v186, 0
  %214 = vmatpush.bf16.msra.mxu0 0
  %215 = vmatpush.bf16.msra.mxu0 0
  %216 = vmatpush.bf16.msra.mxu0 0
  %217 = vmatpush.bf16.msra.mxu0 0
  %218 = vmatpush.bf16.msra.mxu0 %v206
  %219 = vmatpush.bf16.msra.mxu0 %v205
  %220 = vmatpush.bf16.msra.mxu0 %v204
  %221 = vmatpush.bf16.msra.mxu0 %v203
  %222 = vmatmul.bf16.gmra.mxu0 %v212
  %v223 = vpop.f32.mrf.mxu0
  %v224 = vadd.f32 0.0, %v223
  %v225 = vpop.f32.mrf.mxu0
  %v226 = vadd.f32 0.0, %v225
  %227 = vdwg.mxu0
  %v228 = vpack.c.bf16 %v226, %v224
  %v229 = vld [vmem:[%s7] sm:$0x1]
  %v231 = vperm.slane %v229, 0
  %233 = vmatpush.bf16.msra.mxu0 0
  %234 = vmatpush.bf16.msra.mxu0 0
  %235 = vmatpush.bf16.msra.mxu0 0
  %236 = vmatpush.bf16.msra.mxu0 0
  %237 = vmatpush.bf16.msra.mxu0 0
  %238 = vmatpush.bf16.msra.mxu0 0
  %239 = vmatpush.bf16.msra.mxu0 0
  %240 = vmatpush.bf16.msra.mxu0 %v228
  %241 = vmatmul.bf16.gmra.mxu0 %v160
  %v242 = vpop.f32.mrf.mxu0
  %v243 = vadd.f32 %v231, %v242
  %v244 = vpop.f32.mrf.mxu0
  %v245 = vadd.f32 %v231, %v244
  %246 = vdwg.mxu0
  %v247 = vmax.f32 %v243, 0.0
  %v248 = vmax.f32 %v245, 0.0
  %v249 = vld [vmem:[%s8] sm:$0xf]
  %v250 = vld [vmem:[%s8 + $0x4] sm:$0xf]
  %v251 = vld [vmem:[%s8 + $0x8] sm:$0xf]
  %v252 = vld [vmem:[%s8 + $0xc] sm:$0xf]
  %v253 = vld [vmem:[%s8 + $0x10] sm:$0xf]
  %v254 = vld [vmem:[%s8 + $0x14] sm:$0xf]
  %v255 = vld [vmem:[%s8 + $0x18] sm:$0xf]
  %v256 = vld [vmem:[%s8 + $0x1c] sm:$0xf]
  %v257 = vpack.c.bf16 %v248, %v247
  %v266 = vunpack.c.l.b16 %v249
  %v267 = vunpack.c.l.b16 %v250
  %v268 = vunpack.c.l.b16 %v251
  %v269 = vunpack.c.l.b16 %v252
  %v270 = vunpack.c.l.b16 %v253
  %v271 = vunpack.c.l.b16 %v254
  %v272 = vunpack.c.l.b16 %v255
  %v273 = vunpack.c.l.b16 %v256
  %v274 = vpack.c.b16 %v267, %v266
  %v275 = vpack.c.b16 %v269, %v268
  %v276 = vpack.c.b16 %v271, %v270
  %v277 = vpack.c.b16 %v273, %v272
  %v283 = vsel %vm130, %v257, 0
  %285 = vmatpush.bf16.msra.mxu0 0
  %286 = vmatpush.bf16.msra.mxu0 0
  %287 = vmatpush.bf16.msra.mxu0 0
  %288 = vmatpush.bf16.msra.mxu0 0
  %289 = vmatpush.bf16.msra.mxu0 %v277
  %290 = vmatpush.bf16.msra.mxu0 %v276
  %291 = vmatpush.bf16.msra.mxu0 %v275
  %292 = vmatpush.bf16.msra.mxu0 %v274
  %293 = vmatmul.bf16.gmra.mxu0 %v283
  %v294 = vpop.f32.mrf.mxu0
  %v295 = vadd.f32 0.0, %v294
  %v296 = vpop.f32.mrf.mxu0
  %v297 = vadd.f32 0.0, %v296
  %298 = vdwg.mxu0
  %v299 = vpack.c.bf16 %v297, %v295
  %v300 = vld [vmem:[%s9] sm:$0x1]
  %v302 = vperm.slane %v300, 0
  %304 = vmatpush.bf16.msra.mxu0 0
  %305 = vmatpush.bf16.msra.mxu0 0
  %306 = vmatpush.bf16.msra.mxu0 0
  %307 = vmatpush.bf16.msra.mxu0 0
  %308 = vmatpush.bf16.msra.mxu0 0
  %309 = vmatpush.bf16.msra.mxu0 0
  %310 = vmatpush.bf16.msra.mxu0 0
  %311 = vmatpush.bf16.msra.mxu0 %v299
  %312 = vmatmul.bf16.gmra.mxu0 %v160
  %v313 = vpop.f32.mrf.mxu0
  %v314 = vadd.f32 %v302, %v313
  %v315 = vpop.f32.mrf.mxu0
  %v316 = vadd.f32 %v302, %v315
  %317 = vdwg.mxu0
  %v318 = vmax.f32 %v314, 0.0
  %v319 = vmax.f32 %v316, 0.0
  %v320 = vadd.f32 %v176, %v318
  %v321 = vadd.f32 %v177, %v319
  %v322 = vmul.f32 %v320, 0.5
  %v323 = vmul.f32 %v321, 0.5
  %v324 = vld [vmem:[%s10] sm:$0xf]
  %v325 = vld [vmem:[%s10 + $0x4] sm:$0xf]
  %v326 = vld [vmem:[%s10 + $0x8] sm:$0xf]
  %v327 = vld [vmem:[%s10 + $0xc] sm:$0xf]
  %v328 = vld [vmem:[%s10 + $0x10] sm:$0xf]
  %v329 = vld [vmem:[%s10 + $0x14] sm:$0xf]
  %v330 = vld [vmem:[%s10 + $0x18] sm:$0xf]
  %v331 = vld [vmem:[%s10 + $0x1c] sm:$0xf]
  %v332 = vpack.c.bf16 %v323, %v322
  %v341 = vunpack.c.l.b16 %v324
  %v342 = vunpack.c.l.b16 %v325
  %v343 = vunpack.c.l.b16 %v326
  %v344 = vunpack.c.l.b16 %v327
  %v345 = vunpack.c.l.b16 %v328
  %v346 = vunpack.c.l.b16 %v329
  %v347 = vunpack.c.l.b16 %v330
  %v348 = vunpack.c.l.b16 %v331
  %v349 = vpack.c.b16 %v342, %v341
  %v350 = vpack.c.b16 %v344, %v343
  %v351 = vpack.c.b16 %v346, %v345
  %v352 = vpack.c.b16 %v348, %v347
  %v358 = vsel %vm130, %v332, 0
  %360 = vmatpush.bf16.msra.mxu0 0
  %361 = vmatpush.bf16.msra.mxu0 0
  %362 = vmatpush.bf16.msra.mxu0 0
  %363 = vmatpush.bf16.msra.mxu0 0
  %364 = vmatpush.bf16.msra.mxu0 %v352
  %365 = vmatpush.bf16.msra.mxu0 %v351
  %366 = vmatpush.bf16.msra.mxu0 %v350
  %367 = vmatpush.bf16.msra.mxu0 %v349
  %368 = vmatmul.bf16.gmra.mxu0 %v358
  %v369 = vpop.f32.mrf.mxu0
  %v370 = vadd.f32 0.0, %v369
  %v371 = vpop.f32.mrf.mxu0
  %v372 = vadd.f32 0.0, %v371
  %373 = vdwg.mxu0
  %v374 = vpack.c.bf16 %v372, %v370
  %v375 = vld [vmem:[%s11] sm:$0x1]
  %v377 = vperm.slane %v375, 0
  %379 = vmatpush.bf16.msra.mxu0 0
  %380 = vmatpush.bf16.msra.mxu0 0
  %381 = vmatpush.bf16.msra.mxu0 0
  %382 = vmatpush.bf16.msra.mxu0 0
  %383 = vmatpush.bf16.msra.mxu0 0
  %384 = vmatpush.bf16.msra.mxu0 0
  %385 = vmatpush.bf16.msra.mxu0 0
  %386 = vmatpush.bf16.msra.mxu0 %v374
  %387 = vmatmul.bf16.gmra.mxu0 %v160
  %v388 = vpop.f32.mrf.mxu0
  %v389 = vadd.f32 %v377, %v388
  %v390 = vpop.f32.mrf.mxu0
  %v391 = vadd.f32 %v377, %v390
  %392 = vdwg.mxu0
  %v393 = vmax.f32 %v389, 0.0
  %v394 = vmax.f32 %v391, 0.0
  %v395 = vld [vmem:[%s12] sm:$0xf]
  %v396 = vld [vmem:[%s12 + $0x4] sm:$0xf]
  %v397 = vld [vmem:[%s12 + $0x8] sm:$0xf]
  %v398 = vld [vmem:[%s12 + $0xc] sm:$0xf]
  %v399 = vld [vmem:[%s12 + $0x10] sm:$0xf]
  %v400 = vld [vmem:[%s12 + $0x14] sm:$0xf]
  %v401 = vld [vmem:[%s12 + $0x18] sm:$0xf]
  %v402 = vld [vmem:[%s12 + $0x1c] sm:$0xf]
  %v403 = vpack.c.bf16 %v394, %v393
  %v412 = vunpack.c.l.b16 %v395
  %v413 = vunpack.c.l.b16 %v396
  %v414 = vunpack.c.l.b16 %v397
  %v415 = vunpack.c.l.b16 %v398
  %v416 = vunpack.c.l.b16 %v399
  %v417 = vunpack.c.l.b16 %v400
  %v418 = vunpack.c.l.b16 %v401
  %v419 = vunpack.c.l.b16 %v402
  %v420 = vpack.c.b16 %v413, %v412
  %v421 = vpack.c.b16 %v415, %v414
  %v422 = vpack.c.b16 %v417, %v416
  %v423 = vpack.c.b16 %v419, %v418
  %v429 = vsel %vm130, %v403, 0
  %431 = vmatpush.bf16.msra.mxu0 0
  %432 = vmatpush.bf16.msra.mxu0 0
  %433 = vmatpush.bf16.msra.mxu0 0
  %434 = vmatpush.bf16.msra.mxu0 0
  %435 = vmatpush.bf16.msra.mxu0 %v423
  %436 = vmatpush.bf16.msra.mxu0 %v422
  %437 = vmatpush.bf16.msra.mxu0 %v421
  %438 = vmatpush.bf16.msra.mxu0 %v420
  %439 = vmatmul.bf16.gmra.mxu0 %v429
  %v440 = vpop.f32.mrf.mxu0
  %v441 = vadd.f32 0.0, %v440
  %v442 = vpop.f32.mrf.mxu0
  %v443 = vadd.f32 0.0, %v442
  %444 = vdwg.mxu0
  %v445 = vpack.c.bf16 %v443, %v441
  %v446 = vld [vmem:[%s13] sm:$0x1]
  %v448 = vperm.slane %v446, 0
  %450 = vmatpush.bf16.msra.mxu0 0
  %451 = vmatpush.bf16.msra.mxu0 0
  %452 = vmatpush.bf16.msra.mxu0 0
  %453 = vmatpush.bf16.msra.mxu0 0
  %454 = vmatpush.bf16.msra.mxu0 0
  %455 = vmatpush.bf16.msra.mxu0 0
  %456 = vmatpush.bf16.msra.mxu0 0
  %457 = vmatpush.bf16.msra.mxu0 %v445
  %458 = vmatmul.bf16.gmra.mxu0 %v160
  %v459 = vpop.f32.mrf.mxu0
  %v460 = vadd.f32 %v448, %v459
  %v461 = vpop.f32.mrf.mxu0
  %v462 = vadd.f32 %v448, %v461
  %463 = vdwg.mxu0
  %v464 = vmax.f32 %v460, 0.0
  %v465 = vmax.f32 %v462, 0.0
  %v466 = vadd.f32 %v322, %v464
  %v467 = vadd.f32 %v323, %v465
  %v468 = vmul.f32 %v466, 0.5
  %v469 = vmul.f32 %v467, 0.5
  %v470 = vld [vmem:[%s14] sm:$0xf]
  %v471 = vld [vmem:[%s14 + $0x4] sm:$0xf]
  %v472 = vld [vmem:[%s14 + $0x8] sm:$0xf]
  %v473 = vld [vmem:[%s14 + $0xc] sm:$0xf]
  %v474 = vld [vmem:[%s14 + $0x10] sm:$0xf]
  %v475 = vld [vmem:[%s14 + $0x14] sm:$0xf]
  %v476 = vld [vmem:[%s14 + $0x18] sm:$0xf]
  %v477 = vld [vmem:[%s14 + $0x1c] sm:$0xf]
  %v478 = vpack.c.bf16 %v469, %v468
  %v487 = vunpack.c.l.b16 %v470
  %v488 = vunpack.c.l.b16 %v471
  %v489 = vunpack.c.l.b16 %v472
  %v490 = vunpack.c.l.b16 %v473
  %v491 = vunpack.c.l.b16 %v474
  %v492 = vunpack.c.l.b16 %v475
  %v493 = vunpack.c.l.b16 %v476
  %v494 = vunpack.c.l.b16 %v477
  %v495 = vpack.c.b16 %v488, %v487
  %v496 = vpack.c.b16 %v490, %v489
  %v497 = vpack.c.b16 %v492, %v491
  %v498 = vpack.c.b16 %v494, %v493
  %v504 = vsel %vm130, %v478, 0
  %506 = vmatpush.bf16.msra.mxu0 0
  %507 = vmatpush.bf16.msra.mxu0 0
  %508 = vmatpush.bf16.msra.mxu0 0
  %509 = vmatpush.bf16.msra.mxu0 0
  %510 = vmatpush.bf16.msra.mxu0 %v498
  %511 = vmatpush.bf16.msra.mxu0 %v497
  %512 = vmatpush.bf16.msra.mxu0 %v496
  %513 = vmatpush.bf16.msra.mxu0 %v495
  %514 = vmatmul.bf16.gmra.mxu0 %v504
  %v515 = vpop.f32.mrf.mxu0
  %v516 = vadd.f32 0.0, %v515
  %v517 = vpop.f32.mrf.mxu0
  %v518 = vadd.f32 0.0, %v517
  %519 = vdwg.mxu0
  %v520 = vpack.c.bf16 %v518, %v516
  %v521 = vld [vmem:[%s15] sm:$0x1]
  %v523 = vperm.slane %v521, 0
  %525 = vmatpush.bf16.msra.mxu0 0
  %526 = vmatpush.bf16.msra.mxu0 0
  %527 = vmatpush.bf16.msra.mxu0 0
  %528 = vmatpush.bf16.msra.mxu0 0
  %529 = vmatpush.bf16.msra.mxu0 0
  %530 = vmatpush.bf16.msra.mxu0 0
  %531 = vmatpush.bf16.msra.mxu0 0
  %532 = vmatpush.bf16.msra.mxu0 %v520
  %533 = vmatmul.bf16.gmra.mxu0 %v160
  %v534 = vpop.f32.mrf.mxu0
  %v535 = vadd.f32 %v523, %v534
  %v536 = vpop.f32.mrf.mxu0
  %v537 = vadd.f32 %v523, %v536
  %538 = vdwg.mxu0
  %539 = vst [vmem:[%s16] sm:$0xff] %v535
  %540 = vst [vmem:[%s16 + $0x8] sm:$0xff] %v537
  %541 = vst.msk [vmem:[%s16] sm:$0xff] %vm130, %v468
  %542 = vst.msk [vmem:[%s16 + $0x8] sm:$0xff] %vm130, %v469
  // Predicated region
  $region66: #{gresnet_forward.2} parent=0 // pred_check
    _
  $region67: #{gresnet_forward.2} parent=0 // pred_check_branch
    %544 = sbr.rel (0) target = $region69
  $region68: #{gresnet_forward.2} parent=0 // pred_region
    _
  $region69: #{gresnet_forward.2} parent=0 // pred_fallthru
    _
  // Predicated region
  $region70: #{gresnet_forward.2} parent=0 // pred_check
    _
  $region71: #{gresnet_forward.2} parent=0 // pred_check_branch
    %546 = sbr.rel (0) target = $region73
  $region72: #{gresnet_forward.2} parent=0 // pred_region
    _
  $region73: #{gresnet_forward.2} parent=0 // pred_fallthru
    _

// kernel: gresnet_forward.3
$region0: #{gresnet_forward.3}
  #allocation0 [shape = 'u32[]', space=smem, size = 0x4, offset = 0x4, fixed_abs, tag = 'smem constant byte address 0x4 - core index']
  #allocation1 [shape = 'u32[72,128]{1,0:T(1,128)}', space=vmem, size = 0x9000, scoped, tag = 'internal scratch']
  %s0 = inlined_call_operand.vmem [shape: bf16[32,32], index: 0, kind: input, shape index: {}]
  %s1 = inlined_call_operand.vmem [shape: f32[32,96], index: 1, kind: input, shape index: {}]
  %s2 = inlined_call_operand.vmem [shape: bf16[96,64], index: 2, kind: input, shape index: {}]
  %s3 = inlined_call_operand.vmem [shape: f32[1,64], index: 3, kind: input, shape index: {}]
  %s4 = inlined_call_operand.vmem [shape: bf16[64,64], index: 4, kind: input, shape index: {}]
  %s5 = inlined_call_operand.vmem [shape: f32[1,64], index: 5, kind: input, shape index: {}]
  %s6 = inlined_call_operand.vmem [shape: bf16[64,64], index: 6, kind: input, shape index: {}]
  %s7 = inlined_call_operand.vmem [shape: f32[1,64], index: 7, kind: input, shape index: {}]
  %s8 = inlined_call_operand.vmem [shape: bf16[64,64], index: 8, kind: input, shape index: {}]
  %s9 = inlined_call_operand.vmem [shape: f32[1,64], index: 9, kind: input, shape index: {}]
  %s10 = inlined_call_operand.vmem [shape: bf16[64,64], index: 10, kind: input, shape index: {}]
  %s11 = inlined_call_operand.vmem [shape: f32[1,64], index: 11, kind: input, shape index: {}]
  %s12 = inlined_call_operand.vmem [shape: bf16[64,64], index: 12, kind: input, shape index: {}]
  %s13 = inlined_call_operand.vmem [shape: f32[1,64], index: 13, kind: input, shape index: {}]
  %s14 = inlined_call_operand.vmem [shape: bf16[64,128], index: 14, kind: input, shape index: {}]
  %s15 = inlined_call_operand.vmem [shape: f32[1,128], index: 15, kind: input, shape index: {}]
  %s16 = inlined_call_operand.vmem [shape: f32[32,128], index: 16, kind: output, shape index: {}]
  %s17 = sld [smem:[#allocation0]]
  $region74: #{gresnet_forward.3} parent=0
    _
  %s19 = ssub.s32 1, %s17
  %s20 = scalar_select 0, %s19, %s17
  // Predicated region
  $region2: #{gresnet_forward.3} parent=0 // pred_check
    _
  $region3: #{gresnet_forward.3} parent=0 // pred_check_branch
    %22 = sbr.rel (0) target = $region5
  $region4: #{gresnet_forward.3} parent=0 // pred_region
    _
  $region5: #{gresnet_forward.3} parent=0 // pred_fallthru
    _
  // Predicated region
  $region6: #{gresnet_forward.3} parent=0 // pred_check
    _
  $region7: #{gresnet_forward.3} parent=0 // pred_check_branch
    %24 = sbr.rel (0) target = $region9
  $region8: #{gresnet_forward.3} parent=0 // pred_region
    _
  $region9: #{gresnet_forward.3} parent=0 // pred_fallthru
    _
  // Predicated region
  $region10: #{gresnet_forward.3} parent=0 // pred_check
    _
  $region11: #{gresnet_forward.3} parent=0 // pred_check_branch
    %26 = sbr.rel (0) target = $region13
  $region12: #{gresnet_forward.3} parent=0 // pred_region
    _
  $region13: #{gresnet_forward.3} parent=0 // pred_fallthru
    _
  // Predicated region
  $region14: #{gresnet_forward.3} parent=0 // pred_check
    _
  $region15: #{gresnet_forward.3} parent=0 // pred_check_branch
    %28 = sbr.rel (0) target = $region17
  $region16: #{gresnet_forward.3} parent=0 // pred_region
    _
  $region17: #{gresnet_forward.3} parent=0 // pred_fallthru
    _
  // Predicated region
  $region18: #{gresnet_forward.3} parent=0 // pred_check
    _
  $region19: #{gresnet_forward.3} parent=0 // pred_check_branch
    %30 = sbr.rel (0) target = $region21
  $region20: #{gresnet_forward.3} parent=0 // pred_region
    _
  $region21: #{gresnet_forward.3} parent=0 // pred_fallthru
    _
  // Predicated region
  $region22: #{gresnet_forward.3} parent=0 // pred_check
    _
  $region23: #{gresnet_forward.3} parent=0 // pred_check_branch
    %32 = sbr.rel (0) target = $region25
  $region24: #{gresnet_forward.3} parent=0 // pred_region
    _
  $region25: #{gresnet_forward.3} parent=0 // pred_fallthru
    _
  // Predicated region
  $region26: #{gresnet_forward.3} parent=0 // pred_check
    _
  $region27: #{gresnet_forward.3} parent=0 // pred_check_branch
    %34 = sbr.rel (0) target = $region29
  $region28: #{gresnet_forward.3} parent=0 // pred_region
    _
  $region29: #{gresnet_forward.3} parent=0 // pred_fallthru
    _
  // Predicated region
  $region30: #{gresnet_forward.3} parent=0 // pred_check
    _
  $region31: #{gresnet_forward.3} parent=0 // pred_check_branch
    %36 = sbr.rel (0) target = $region33
  $region32: #{gresnet_forward.3} parent=0 // pred_region
    _
  $region33: #{gresnet_forward.3} parent=0 // pred_fallthru
    _
  // Predicated region
  $region34: #{gresnet_forward.3} parent=0 // pred_check
    _
  $region35: #{gresnet_forward.3} parent=0 // pred_check_branch
    %38 = sbr.rel (0) target = $region37
  $region36: #{gresnet_forward.3} parent=0 // pred_region
    _
  $region37: #{gresnet_forward.3} parent=0 // pred_fallthru
    _
  // Predicated region
  $region38: #{gresnet_forward.3} parent=0 // pred_check
    _
  $region39: #{gresnet_forward.3} parent=0 // pred_check_branch
    %40 = sbr.rel (0) target = $region41
  $region40: #{gresnet_forward.3} parent=0 // pred_region
    _
  $region41: #{gresnet_forward.3} parent=0 // pred_fallthru
    _
  // Predicated region
  $region42: #{gresnet_forward.3} parent=0 // pred_check
    _
  $region43: #{gresnet_forward.3} parent=0 // pred_check_branch
    %42 = sbr.rel (0) target = $region45
  $region44: #{gresnet_forward.3} parent=0 // pred_region
    _
  $region45: #{gresnet_forward.3} parent=0 // pred_fallthru
    _
  // Predicated region
  $region46: #{gresnet_forward.3} parent=0 // pred_check
    _
  $region47: #{gresnet_forward.3} parent=0 // pred_check_branch
    %44 = sbr.rel (0) target = $region49
  $region48: #{gresnet_forward.3} parent=0 // pred_region
    _
  $region49: #{gresnet_forward.3} parent=0 // pred_fallthru
    _
  // Predicated region
  $region50: #{gresnet_forward.3} parent=0 // pred_check
    _
  $region51: #{gresnet_forward.3} parent=0 // pred_check_branch
    %46 = sbr.rel (0) target = $region53
  $region52: #{gresnet_forward.3} parent=0 // pred_region
    _
  $region53: #{gresnet_forward.3} parent=0 // pred_fallthru
    _
  // Predicated region
  $region54: #{gresnet_forward.3} parent=0 // pred_check
    _
  $region55: #{gresnet_forward.3} parent=0 // pred_check_branch
    %48 = sbr.rel (0) target = $region57
  $region56: #{gresnet_forward.3} parent=0 // pred_region
    _
  $region57: #{gresnet_forward.3} parent=0 // pred_fallthru
    _
  // Predicated region
  $region58: #{gresnet_forward.3} parent=0 // pred_check
    _
  $region59: #{gresnet_forward.3} parent=0 // pred_check_branch
    %50 = sbr.rel (0) target = $region61
  $region60: #{gresnet_forward.3} parent=0 // pred_region
    _
  $region61: #{gresnet_forward.3} parent=0 // pred_fallthru
    _
  // Predicated region
  $region62: #{gresnet_forward.3} parent=0 // pred_check
    _
  $region63: #{gresnet_forward.3} parent=0 // pred_check_branch
    %52 = sbr.rel (0) target = $region65
  $region64: #{gresnet_forward.3} parent=0 // pred_region
    _
  $region65: #{gresnet_forward.3} parent=0 // pred_fallthru
    _
  %v54 = vld [vmem:[%s0] sm:$0xf]
  %v55 = vld [vmem:[%s0 + $0x4] sm:$0xf]
  %v56 = vld [vmem:[%s0 + $0x8] sm:$0xf]
  %v57 = vld [vmem:[%s0 + $0xc] sm:$0xf]
  %v58 = vld [vmem:[%s1] sm:$0xff]
  %v59 = vld [vmem:[%s1 + $0x8] sm:$0xff]
  %v60 = vld [vmem:[%s1 + $0x10] sm:$0xff]
  %v61 = vld [vmem:[%s1 + $0x18] sm:$0xff]
  %v62 = vld [vmem:[%s2] sm:$0xf]
  %v63 = vld [vmem:[%s2 + $0x4] sm:$0xf]
  %v64 = vld [vmem:[%s2 + $0x8] sm:$0xf]
  %v65 = vld [vmem:[%s2 + $0xc] sm:$0xf]
  %v66 = vld [vmem:[%s2 + $0x10] sm:$0xf]
  %v67 = vld [vmem:[%s2 + $0x14] sm:$0xf]
  %v68 = vld [vmem:[%s2 + $0x18] sm:$0xf]
  %v69 = vld [vmem:[%s2 + $0x1c] sm:$0xf]
  %v70 = vld [vmem:[%s2 + $0x20] sm:$0xf]
  %v71 = vld [vmem:[%s2 + $0x24] sm:$0xf]
  %v72 = vld [vmem:[%s2 + $0x28] sm:$0xf]
  %v73 = vld [vmem:[%s2 + $0x2c] sm:$0xf]
  %v74 = vpack.c.bf16 %v59, %v58
  %v75 = vpack.c.bf16 %v61, %v60
  %v76 = vld [vmem:[%s3] sm:$0x1]
  %v78 = vperm.slane %v76, 0
  %v92 = vunpack.c.l.b16 %v62
  %v93 = vunpack.c.l.b16 %v63
  %v94 = vunpack.c.l.b16 %v64
  %v95 = vunpack.c.l.b16 %v65
  %v96 = vunpack.c.l.b16 %v66
  %v97 = vunpack.c.l.b16 %v67
  %v98 = vunpack.c.l.b16 %v68
  %v99 = vunpack.c.l.b16 %v69
  %v100 = vunpack.c.l.b16 %v70
  %v101 = vunpack.c.l.b16 %v71
  %v102 = vunpack.c.l.b16 %v72
  %v103 = vunpack.c.l.b16 %v73
  %v104 = vpack.c.b16 %v93, %v92
  %v105 = vpack.c.b16 %v95, %v94
  %v106 = vpack.c.b16 %v97, %v96
  %v107 = vpack.c.b16 %v99, %v98
  %v108 = vpack.c.b16 %v101, %v100
  %v109 = vpack.c.b16 %v103, %v102
  %vm116 = vcmask 785408
  %v118 = vsel %vm116, %v74, 0
  %v121 = vsel %vm116, %v75, 0
  %123 = vmatpush.bf16.msra.mxu0 0
  %124 = vmatpush.bf16.msra.mxu0 0
  %125 = vmatpush.bf16.msra.mxu0 %v109
  %126 = vmatpush.bf16.msra.mxu0 %v108
  %127 = vmatpush.bf16.msra.mxu0 %v107
  %128 = vmatpush.bf16.msra.mxu0 %v106
  %129 = vmatpush.bf16.msra.mxu0 %v105
  %130 = vmatpush.bf16.msra.mxu0 %v104
  %131 = vmatmul.bf16.gmra.mxu0 %v118
  %v132 = vpop.f32.mrf.mxu0
  %v133 = vadd.f32 %v78, %v132
  %v134 = vpop.f32.mrf.mxu0
  %v135 = vadd.f32 %v78, %v134
  %136 = vmatmul.bf16.gmra.mxu0 %v121
  %v137 = vpop.f32.mrf.mxu0
  %v138 = vadd.f32 %v78, %v137
  %v139 = vpop.f32.mrf.mxu0
  %v140 = vadd.f32 %v78, %v139
  %141 = vdwg.mxu0
  %v142 = vld [vmem:[%s4] sm:$0xf]
  %v143 = vld [vmem:[%s4 + $0x4] sm:$0xf]
  %v144 = vld [vmem:[%s4 + $0x8] sm:$0xf]
  %v145 = vld [vmem:[%s4 + $0xc] sm:$0xf]
  %v146 = vld [vmem:[%s4 + $0x10] sm:$0xf]
  %v147 = vld [vmem:[%s4 + $0x14] sm:$0xf]
  %v148 = vld [vmem:[%s4 + $0x18] sm:$0xf]
  %v149 = vld [vmem:[%s4 + $0x1c] sm:$0xf]
  %v150 = vpack.c.bf16 %v135, %v133
  %v151 = vpack.c.bf16 %v140, %v138
  %v160 = vunpack.c.l.b16 %v142
  %v161 = vunpack.c.l.b16 %v143
  %v162 = vunpack.c.l.b16 %v144
  %v163 = vunpack.c.l.b16 %v145
  %v164 = vunpack.c.l.b16 %v146
  %v165 = vunpack.c.l.b16 %v147
  %v166 = vunpack.c.l.b16 %v148
  %v167 = vunpack.c.l.b16 %v149
  %v168 = vpack.c.b16 %v161, %v160
  %v169 = vpack.c.b16 %v163, %v162
  %v170 = vpack.c.b16 %v165, %v164
  %v171 = vpack.c.b16 %v167, %v166
  %vm176 = vcmask 523264
  %v178 = vsel %vm176, %v150, 0
  %v181 = vsel %vm176, %v151, 0
  %183 = vmatpush.bf16.msra.mxu0 0
  %184 = vmatpush.bf16.msra.mxu0 0
  %185 = vmatpush.bf16.msra.mxu0 0
  %186 = vmatpush.bf16.msra.mxu0 0
  %187 = vmatpush.bf16.msra.mxu0 %v171
  %188 = vmatpush.bf16.msra.mxu0 %v170
  %189 = vmatpush.bf16.msra.mxu0 %v169
  %190 = vmatpush.bf16.msra.mxu0 %v168
  %191 = vmatmul.bf16.gmra.mxu0 %v178
  %v192 = vpop.f32.mrf.mxu0
  %v193 = vadd.f32 0.0, %v192
  %v194 = vpop.f32.mrf.mxu0
  %v195 = vadd.f32 0.0, %v194
  %196 = vmatmul.bf16.gmra.mxu0 %v181
  %v197 = vpop.f32.mrf.mxu0
  %v198 = vadd.f32 0.0, %v197
  %v199 = vpop.f32.mrf.mxu0
  %v200 = vadd.f32 0.0, %v199
  %201 = vdwg.mxu0
  %v202 = vpack.c.bf16 %v195, %v193
  %v203 = vpack.c.bf16 %v200, %v198
  %v204 = vld [vmem:[%s5] sm:$0x1]
  %v206 = vperm.slane %v204, 0
  %v212 = vunpack.c.l.b16 %v54
  %v213 = vunpack.c.l.b16 %v55
  %v214 = vunpack.c.l.b16 %v56
  %v215 = vunpack.c.l.b16 %v57
  %v216 = vpack.c.b16 %v213, %v212
  %v217 = vpack.c.b16 %v215, %v214
  %vm218 = vcmask 261120
  %v220 = vsel %vm218, %v216, 0
  %v223 = vsel %vm218, %v217, 0
  %225 = vmatpush.bf16.msra.mxu0 0
  %226 = vmatpush.bf16.msra.mxu0 0
  %227 = vmatpush.bf16.msra.mxu0 0
  %228 = vmatpush.bf16.msra.mxu0 0
  %229 = vmatpush.bf16.msra.mxu0 0
  %230 = vmatpush.bf16.msra.mxu0 0
  %231 = vmatpush.bf16.msra.mxu0 %v203
  %232 = vmatpush.bf16.msra.mxu0 %v202
  %233 = vmatmul.bf16.gmra.mxu0 %v220
  %v234 = vpop.f32.mrf.mxu0
  %v235 = vadd.f32 %v206, %v234
  %v236 = vpop.f32.mrf.mxu0
  %v237 = vadd.f32 %v206, %v236
  %238 = vmatmul.bf16.gmra.mxu0 %v223
  %v239 = vpop.f32.mrf.mxu0
  %v240 = vadd.f32 %v206, %v239
  %v241 = vpop.f32.mrf.mxu0
  %v242 = vadd.f32 %v206, %v241
  %243 = vdwg.mxu0
  %v244 = vmax.f32 %v235, 0.0
  %v245 = vmax.f32 %v237, 0.0
  %v246 = vmax.f32 %v240, 0.0
  %v247 = vmax.f32 %v242, 0.0
  %v248 = vld [vmem:[%s6] sm:$0xf]
  %v249 = vld [vmem:[%s6 + $0x4] sm:$0xf]
  %v250 = vld [vmem:[%s6 + $0x8] sm:$0xf]
  %v251 = vld [vmem:[%s6 + $0xc] sm:$0xf]
  %v252 = vld [vmem:[%s6 + $0x10] sm:$0xf]
  %v253 = vld [vmem:[%s6 + $0x14] sm:$0xf]
  %v254 = vld [vmem:[%s6 + $0x18] sm:$0xf]
  %v255 = vld [vmem:[%s6 + $0x1c] sm:$0xf]
  %v256 = vpack.c.bf16 %v245, %v244
  %v257 = vpack.c.bf16 %v247, %v246
  %v266 = vunpack.c.l.b16 %v248
  %v267 = vunpack.c.l.b16 %v249
  %v268 = vunpack.c.l.b16 %v250
  %v269 = vunpack.c.l.b16 %v251
  %v270 = vunpack.c.l.b16 %v252
  %v271 = vunpack.c.l.b16 %v253
  %v272 = vunpack.c.l.b16 %v254
  %v273 = vunpack.c.l.b16 %v255
  %v274 = vpack.c.b16 %v267, %v266
  %v275 = vpack.c.b16 %v269, %v268
  %v276 = vpack.c.b16 %v271, %v270
  %v277 = vpack.c.b16 %v273, %v272
  %v283 = vsel %vm176, %v256, 0
  %v286 = vsel %vm176, %v257, 0
  %288 = vmatpush.bf16.msra.mxu0 0
  %289 = vmatpush.bf16.msra.mxu0 0
  %290 = vmatpush.bf16.msra.mxu0 0
  %291 = vmatpush.bf16.msra.mxu0 0
  %292 = vmatpush.bf16.msra.mxu0 %v277
  %293 = vmatpush.bf16.msra.mxu0 %v276
  %294 = vmatpush.bf16.msra.mxu0 %v275
  %295 = vmatpush.bf16.msra.mxu0 %v274
  %296 = vmatmul.bf16.gmra.mxu0 %v283
  %v297 = vpop.f32.mrf.mxu0
  %v298 = vadd.f32 0.0, %v297
  %v299 = vpop.f32.mrf.mxu0
  %v300 = vadd.f32 0.0, %v299
  %301 = vmatmul.bf16.gmra.mxu0 %v286
  %v302 = vpop.f32.mrf.mxu0
  %v303 = vadd.f32 0.0, %v302
  %v304 = vpop.f32.mrf.mxu0
  %v305 = vadd.f32 0.0, %v304
  %306 = vdwg.mxu0
  %v307 = vpack.c.bf16 %v300, %v298
  %v308 = vpack.c.bf16 %v305, %v303
  %v309 = vld [vmem:[%s7] sm:$0x1]
  %v311 = vperm.slane %v309, 0
  %313 = vmatpush.bf16.msra.mxu0 0
  %314 = vmatpush.bf16.msra.mxu0 0
  %315 = vmatpush.bf16.msra.mxu0 0
  %316 = vmatpush.bf16.msra.mxu0 0
  %317 = vmatpush.bf16.msra.mxu0 0
  %318 = vmatpush.bf16.msra.mxu0 0
  %319 = vmatpush.bf16.msra.mxu0 %v308
  %320 = vmatpush.bf16.msra.mxu0 %v307
  %321 = vmatmul.bf16.gmra.mxu0 %v220
  %v322 = vpop.f32.mrf.mxu0
  %v323 = vadd.f32 %v311, %v322
  %v324 = vpop.f32.mrf.mxu0
  %v325 = vadd.f32 %v311, %v324
  %326 = vmatmul.bf16.gmra.mxu0 %v223
  %v327 = vpop.f32.mrf.mxu0
  %v328 = vadd.f32 %v311, %v327
  %v329 = vpop.f32.mrf.mxu0
  %v330 = vadd.f32 %v311, %v329
  %331 = vdwg.mxu0
  %v332 = vmax.f32 %v323, 0.0
  %v333 = vmax.f32 %v325, 0.0
  %v334 = vmax.f32 %v328, 0.0
  %v335 = vmax.f32 %v330, 0.0
  %v336 = vld [vmem:[%s8] sm:$0xf]
  %v337 = vld [vmem:[%s8 + $0x4] sm:$0xf]
  %v338 = vld [vmem:[%s8 + $0x8] sm:$0xf]
  %v339 = vld [vmem:[%s8 + $0xc] sm:$0xf]
  %v340 = vld [vmem:[%s8 + $0x10] sm:$0xf]
  %v341 = vld [vmem:[%s8 + $0x14] sm:$0xf]
  %v342 = vld [vmem:[%s8 + $0x18] sm:$0xf]
  %v343 = vld [vmem:[%s8 + $0x1c] sm:$0xf]
  %v344 = vpack.c.bf16 %v333, %v332
  %v345 = vpack.c.bf16 %v335, %v334
  %v354 = vunpack.c.l.b16 %v336
  %v355 = vunpack.c.l.b16 %v337
  %v356 = vunpack.c.l.b16 %v338
  %v357 = vunpack.c.l.b16 %v339
  %v358 = vunpack.c.l.b16 %v340
  %v359 = vunpack.c.l.b16 %v341
  %v360 = vunpack.c.l.b16 %v342
  %v361 = vunpack.c.l.b16 %v343
  %v362 = vpack.c.b16 %v355, %v354
  %v363 = vpack.c.b16 %v357, %v356
  %v364 = vpack.c.b16 %v359, %v358
  %v365 = vpack.c.b16 %v361, %v360
  %v371 = vsel %vm176, %v344, 0
  %v374 = vsel %vm176, %v345, 0
  %376 = vmatpush.bf16.msra.mxu0 0
  %377 = vmatpush.bf16.msra.mxu0 0
  %378 = vmatpush.bf16.msra.mxu0 0
  %379 = vmatpush.bf16.msra.mxu0 0
  %380 = vmatpush.bf16.msra.mxu0 %v365
  %381 = vmatpush.bf16.msra.mxu0 %v364
  %382 = vmatpush.bf16.msra.mxu0 %v363
  %383 = vmatpush.bf16.msra.mxu0 %v362
  %384 = vmatmul.bf16.gmra.mxu0 %v371
  %v385 = vpop.f32.mrf.mxu0
  %v386 = vadd.f32 0.0, %v385
  %v387 = vpop.f32.mrf.mxu0
  %v388 = vadd.f32 0.0, %v387
  %389 = vmatmul.bf16.gmra.mxu0 %v374
  %v390 = vpop.f32.mrf.mxu0
  %v391 = vadd.f32 0.0, %v390
  %v392 = vpop.f32.mrf.mxu0
  %v393 = vadd.f32 0.0, %v392
  %394 = vdwg.mxu0
  %v395 = vpack.c.bf16 %v388, %v386
  %v396 = vpack.c.bf16 %v393, %v391
  %v397 = vld [vmem:[%s9] sm:$0x1]
  %v399 = vperm.slane %v397, 0
  %401 = vmatpush.bf16.msra.mxu0 0
  %402 = vmatpush.bf16.msra.mxu0 0
  %403 = vmatpush.bf16.msra.mxu0 0
  %404 = vmatpush.bf16.msra.mxu0 0
  %405 = vmatpush.bf16.msra.mxu0 0
  %406 = vmatpush.bf16.msra.mxu0 0
  %407 = vmatpush.bf16.msra.mxu0 %v396
  %408 = vmatpush.bf16.msra.mxu0 %v395
  %409 = vmatmul.bf16.gmra.mxu0 %v220
  %v410 = vpop.f32.mrf.mxu0
  %v411 = vadd.f32 %v399, %v410
  %v412 = vpop.f32.mrf.mxu0
  %v413 = vadd.f32 %v399, %v412
  %414 = vmatmul.bf16.gmra.mxu0 %v223
  %v415 = vpop.f32.mrf.mxu0
  %v416 = vadd.f32 %v399, %v415
  %v417 = vpop.f32.mrf.mxu0
  %v418 = vadd.f32 %v399, %v417
  %419 = vdwg.mxu0
  %v420 = vmax.f32 %v411, 0.0
  %v421 = vmax.f32 %v413, 0.0
  %v422 = vmax.f32 %v416, 0.0
  %v423 = vmax.f32 %v418, 0.0
  %v424 = vadd.f32 %v244, %v420
  %v425 = vadd.f32 %v245, %v421
  %v426 = vadd.f32 %v246, %v422
  %v427 = vadd.f32 %v247, %v423
  %v428 = vmul.f32 %v424, 0.5
  %v429 = vmul.f32 %v425, 0.5
  %v430 = vmul.f32 %v426, 0.5
  %v431 = vmul.f32 %v427, 0.5
  %v432 = vld [vmem:[%s10] sm:$0xf]
  %v433 = vld [vmem:[%s10 + $0x4] sm:$0xf]
  %v434 = vld [vmem:[%s10 + $0x8] sm:$0xf]
  %v435 = vld [vmem:[%s10 + $0xc] sm:$0xf]
  %v436 = vld [vmem:[%s10 + $0x10] sm:$0xf]
  %v437 = vld [vmem:[%s10 + $0x14] sm:$0xf]
  %v438 = vld [vmem:[%s10 + $0x18] sm:$0xf]
  %v439 = vld [vmem:[%s10 + $0x1c] sm:$0xf]
  %v440 = vpack.c.bf16 %v429, %v428
  %v441 = vpack.c.bf16 %v431, %v430
  %v450 = vunpack.c.l.b16 %v432
  %v451 = vunpack.c.l.b16 %v433
  %v452 = vunpack.c.l.b16 %v434
  %v453 = vunpack.c.l.b16 %v435
  %v454 = vunpack.c.l.b16 %v436
  %v455 = vunpack.c.l.b16 %v437
  %v456 = vunpack.c.l.b16 %v438
  %v457 = vunpack.c.l.b16 %v439
  %v458 = vpack.c.b16 %v451, %v450
  %v459 = vpack.c.b16 %v453, %v452
  %v460 = vpack.c.b16 %v455, %v454
  %v461 = vpack.c.b16 %v457, %v456
  %v467 = vsel %vm176, %v440, 0
  %v470 = vsel %vm176, %v441, 0
  %472 = vmatpush.bf16.msra.mxu0 0
  %473 = vmatpush.bf16.msra.mxu0 0
  %474 = vmatpush.bf16.msra.mxu0 0
  %475 = vmatpush.bf16.msra.mxu0 0
  %476 = vmatpush.bf16.msra.mxu0 %v461
  %477 = vmatpush.bf16.msra.mxu0 %v460
  %478 = vmatpush.bf16.msra.mxu0 %v459
  %479 = vmatpush.bf16.msra.mxu0 %v458
  %480 = vmatmul.bf16.gmra.mxu0 %v467
  %v481 = vpop.f32.mrf.mxu0
  %v482 = vadd.f32 0.0, %v481
  %v483 = vpop.f32.mrf.mxu0
  %v484 = vadd.f32 0.0, %v483
  %485 = vmatmul.bf16.gmra.mxu0 %v470
  %v486 = vpop.f32.mrf.mxu0
  %v487 = vadd.f32 0.0, %v486
  %v488 = vpop.f32.mrf.mxu0
  %v489 = vadd.f32 0.0, %v488
  %490 = vdwg.mxu0
  %v491 = vpack.c.bf16 %v484, %v482
  %v492 = vpack.c.bf16 %v489, %v487
  %v493 = vld [vmem:[%s11] sm:$0x1]
  %v495 = vperm.slane %v493, 0
  %497 = vmatpush.bf16.msra.mxu0 0
  %498 = vmatpush.bf16.msra.mxu0 0
  %499 = vmatpush.bf16.msra.mxu0 0
  %500 = vmatpush.bf16.msra.mxu0 0
  %501 = vmatpush.bf16.msra.mxu0 0
  %502 = vmatpush.bf16.msra.mxu0 0
  %503 = vmatpush.bf16.msra.mxu0 %v492
  %504 = vmatpush.bf16.msra.mxu0 %v491
  %505 = vmatmul.bf16.gmra.mxu0 %v220
  %v506 = vpop.f32.mrf.mxu0
  %v507 = vadd.f32 %v495, %v506
  %v508 = vpop.f32.mrf.mxu0
  %v509 = vadd.f32 %v495, %v508
  %510 = vmatmul.bf16.gmra.mxu0 %v223
  %v511 = vpop.f32.mrf.mxu0
  %v512 = vadd.f32 %v495, %v511
  %v513 = vpop.f32.mrf.mxu0
  %v514 = vadd.f32 %v495, %v513
  %515 = vdwg.mxu0
  %v516 = vmax.f32 %v507, 0.0
  %v517 = vmax.f32 %v509, 0.0
  %v518 = vmax.f32 %v512, 0.0
  %v519 = vmax.f32 %v514, 0.0
  %v520 = vld [vmem:[%s12] sm:$0xf]
  %v521 = vld [vmem:[%s12 + $0x4] sm:$0xf]
  %v522 = vld [vmem:[%s12 + $0x8] sm:$0xf]
  %v523 = vld [vmem:[%s12 + $0xc] sm:$0xf]
  %v524 = vld [vmem:[%s12 + $0x10] sm:$0xf]
  %v525 = vld [vmem:[%s12 + $0x14] sm:$0xf]
  %v526 = vld [vmem:[%s12 + $0x18] sm:$0xf]
  %v527 = vld [vmem:[%s12 + $0x1c] sm:$0xf]
  %v528 = vpack.c.bf16 %v517, %v516
  %v529 = vpack.c.bf16 %v519, %v518
  %v538 = vunpack.c.l.b16 %v520
  %v539 = vunpack.c.l.b16 %v521
  %v540 = vunpack.c.l.b16 %v522
  %v541 = vunpack.c.l.b16 %v523
  %v542 = vunpack.c.l.b16 %v524
  %v543 = vunpack.c.l.b16 %v525
  %v544 = vunpack.c.l.b16 %v526
  %v545 = vunpack.c.l.b16 %v527
  %v546 = vpack.c.b16 %v539, %v538
  %v547 = vpack.c.b16 %v541, %v540
  %v548 = vpack.c.b16 %v543, %v542
  %v549 = vpack.c.b16 %v545, %v544
  %v555 = vsel %vm176, %v528, 0
  %v558 = vsel %vm176, %v529, 0
  %560 = vmatpush.bf16.msra.mxu0 0
  %561 = vmatpush.bf16.msra.mxu0 0
  %562 = vmatpush.bf16.msra.mxu0 0
  %563 = vmatpush.bf16.msra.mxu0 0
  %564 = vmatpush.bf16.msra.mxu0 %v549
  %565 = vmatpush.bf16.msra.mxu0 %v548
  %566 = vmatpush.bf16.msra.mxu0 %v547
  %567 = vmatpush.bf16.msra.mxu0 %v546
  %568 = vmatmul.bf16.gmra.mxu0 %v555
  %v569 = vpop.f32.mrf.mxu0
  %v570 = vadd.f32 0.0, %v569
  %v571 = vpop.f32.mrf.mxu0
  %v572 = vadd.f32 0.0, %v571
  %573 = vmatmul.bf16.gmra.mxu0 %v558
  %v574 = vpop.f32.mrf.mxu0
  %v575 = vadd.f32 0.0, %v574
  %v576 = vpop.f32.mrf.mxu0
  %v577 = vadd.f32 0.0, %v576
  %578 = vdwg.mxu0
  %v579 = vpack.c.bf16 %v572, %v570
  %v580 = vpack.c.bf16 %v577, %v575
  %v581 = vld [vmem:[%s13] sm:$0x1]
  %v583 = vperm.slane %v581, 0
  %585 = vmatpush.bf16.msra.mxu0 0
  %586 = vmatpush.bf16.msra.mxu0 0
  %587 = vmatpush.bf16.msra.mxu0 0
  %588 = vmatpush.bf16.msra.mxu0 0
  %589 = vmatpush.bf16.msra.mxu0 0
  %590 = vmatpush.bf16.msra.mxu0 0
  %591 = vmatpush.bf16.msra.mxu0 %v580
  %592 = vmatpush.bf16.msra.mxu0 %v579
  %593 = vmatmul.bf16.gmra.mxu0 %v220
  %v594 = vpop.f32.mrf.mxu0
  %v595 = vadd.f32 %v583, %v594
  %v596 = vpop.f32.mrf.mxu0
  %v597 = vadd.f32 %v583, %v596
  %598 = vmatmul.bf16.gmra.mxu0 %v223
  %v599 = vpop.f32.mrf.mxu0
  %v600 = vadd.f32 %v583, %v599
  %v601 = vpop.f32.mrf.mxu0
  %v602 = vadd.f32 %v583, %v601
  %603 = vdwg.mxu0
  %v604 = vmax.f32 %v595, 0.0
  %v605 = vmax.f32 %v597, 0.0
  %v606 = vmax.f32 %v600, 0.0
  %v607 = vmax.f32 %v602, 0.0
  %v608 = vadd.f32 %v428, %v604
  %v609 = vadd.f32 %v429, %v605
  %v610 = vadd.f32 %v430, %v606
  %v611 = vadd.f32 %v431, %v607
  %v612 = vmul.f32 %v608, 0.5
  %v613 = vmul.f32 %v609, 0.5
  %v614 = vmul.f32 %v610, 0.5
  %v615 = vmul.f32 %v611, 0.5
  %v616 = vld [vmem:[%s14] sm:$0xf]
  %v617 = vld [vmem:[%s14 + $0x4] sm:$0xf]
  %v618 = vld [vmem:[%s14 + $0x8] sm:$0xf]
  %v619 = vld [vmem:[%s14 + $0xc] sm:$0xf]
  %v620 = vld [vmem:[%s14 + $0x10] sm:$0xf]
  %v621 = vld [vmem:[%s14 + $0x14] sm:$0xf]
  %v622 = vld [vmem:[%s14 + $0x18] sm:$0xf]
  %v623 = vld [vmem:[%s14 + $0x1c] sm:$0xf]
  %v624 = vpack.c.bf16 %v613, %v612
  %v625 = vpack.c.bf16 %v615, %v614
  %v634 = vunpack.c.l.b16 %v616
  %v635 = vunpack.c.l.b16 %v617
  %v636 = vunpack.c.l.b16 %v618
  %v637 = vunpack.c.l.b16 %v619
  %v638 = vunpack.c.l.b16 %v620
  %v639 = vunpack.c.l.b16 %v621
  %v640 = vunpack.c.l.b16 %v622
  %v641 = vunpack.c.l.b16 %v623
  %v642 = vpack.c.b16 %v635, %v634
  %v643 = vpack.c.b16 %v637, %v636
  %v644 = vpack.c.b16 %v639, %v638
  %v645 = vpack.c.b16 %v641, %v640
  %v651 = vsel %vm176, %v624, 0
  %v654 = vsel %vm176, %v625, 0
  %656 = vmatpush.bf16.msra.mxu0 0
  %657 = vmatpush.bf16.msra.mxu0 0
  %658 = vmatpush.bf16.msra.mxu0 0
  %659 = vmatpush.bf16.msra.mxu0 0
  %660 = vmatpush.bf16.msra.mxu0 %v645
  %661 = vmatpush.bf16.msra.mxu0 %v644
  %662 = vmatpush.bf16.msra.mxu0 %v643
  %663 = vmatpush.bf16.msra.mxu0 %v642
  %664 = vmatmul.bf16.gmra.mxu0 %v651
  %v665 = vpop.f32.mrf.mxu0
  %v666 = vadd.f32 0.0, %v665
  %v667 = vpop.f32.mrf.mxu0
  %v668 = vadd.f32 0.0, %v667
  %669 = vmatmul.bf16.gmra.mxu0 %v654
  %v670 = vpop.f32.mrf.mxu0
  %v671 = vadd.f32 0.0, %v670
  %v672 = vpop.f32.mrf.mxu0
  %v673 = vadd.f32 0.0, %v672
  %674 = vdwg.mxu0
  %v675 = vpack.c.bf16 %v668, %v666
  %v676 = vpack.c.bf16 %v673, %v671
  %v677 = vld [vmem:[%s15] sm:$0x1]
  %v679 = vperm.slane %v677, 0
  %681 = vmatpush.bf16.msra.mxu0 0
  %682 = vmatpush.bf16.msra.mxu0 0
  %683 = vmatpush.bf16.msra.mxu0 0
  %684 = vmatpush.bf16.msra.mxu0 0
  %685 = vmatpush.bf16.msra.mxu0 0
  %686 = vmatpush.bf16.msra.mxu0 0
  %687 = vmatpush.bf16.msra.mxu0 %v676
  %688 = vmatpush.bf16.msra.mxu0 %v675
  %689 = vmatmul.bf16.gmra.mxu0 %v220
  %v690 = vpop.f32.mrf.mxu0
  %v691 = vadd.f32 %v679, %v690
  %v692 = vpop.f32.mrf.mxu0
  %v693 = vadd.f32 %v679, %v692
  %694 = vmatmul.bf16.gmra.mxu0 %v223
  %v695 = vpop.f32.mrf.mxu0
  %v696 = vadd.f32 %v679, %v695
  %v697 = vpop.f32.mrf.mxu0
  %v698 = vadd.f32 %v679, %v697
  %699 = vdwg.mxu0
  %700 = vst [vmem:[%s16] sm:$0xff] %v691
  %701 = vst [vmem:[%s16 + $0x8] sm:$0xff] %v693
  %702 = vst [vmem:[%s16 + $0x10] sm:$0xff] %v696
  %703 = vst [vmem:[%s16 + $0x18] sm:$0xff] %v698
  %704 = vst.msk [vmem:[%s16] sm:$0xff] %vm176, %v612
  %705 = vst.msk [vmem:[%s16 + $0x8] sm:$0xff] %vm176, %v613
  %706 = vst.msk [vmem:[%s16 + $0x10] sm:$0xff] %vm176, %v614
  %707 = vst.msk [vmem:[%s16 + $0x18] sm:$0xff] %vm176, %v615
  // Predicated region
  $region66: #{gresnet_forward.3} parent=0 // pred_check
    _
  $region67: #{gresnet_forward.3} parent=0 // pred_check_branch
    %709 = sbr.rel (0) target = $region69
  $region68: #{gresnet_forward.3} parent=0 // pred_region
    _
  $region69: #{gresnet_forward.3} parent=0 // pred_fallthru
    _
  // Predicated region
  $region70: #{gresnet_forward.3} parent=0 // pred_check
    _
  $region71: #{gresnet_forward.3} parent=0 // pred_check_branch
    %711 = sbr.rel (0) target = $region73
  $region72: #{gresnet_forward.3} parent=0 // pred_region
    _
  $region73: #{gresnet_forward.3} parent=0 // pred_fallthru
    _

</llo_original>
